<compile_context>
chip_gen: v6e
topology: v6e:2x2x1
jax: 0.10.0
libtpu: 0.0.40
codegen_flags: <defaults>
</compile_context>

<pallas_src>
import jax
import jax.numpy as jnp
from jax.experimental import pallas as pl
from jax.experimental.pallas import tpu as pltpu

LANE = 128  # lane width: output features padded to a multiple of this


def _round_up(x, m):
    return (x + m - 1) // m * m


def linear_kernel(x_ref, w_ref, b_ref, o_ref):
    # x_ref: (tile_b, K)  w_ref: (K, N_pad)  b_ref: (1, N_pad)  o_ref: (tile_b, N_pad)
    # Canonical (M,K)x(K,N) MXU matmul, f32 accumulation, lane-dense output.
    acc = jnp.dot(x_ref[...], w_ref[...], preferred_element_type=jnp.float32)
    o_ref[...] = (acc + b_ref[...]).astype(o_ref.dtype)


def prepare_params(weight, bias):
    """One-time (per weight) prep, hoisted out of the per-call forward path:
    zero-pad out-features to a lane multiple and transpose to (K, N_pad) so the
    kernel runs a transpose-free MXU matmul.  Reuse the result across calls."""
    n, k = weight.shape
    n_pad = _round_up(n, LANE)
    # Padded rows / bias entries are zero, so the extra output lanes are exact
    # zeros and are sliced away in the wrapper.
    w_t = jnp.pad(weight, ((0, n_pad - n), (0, 0))).T          # (K, N_pad)
    b_row = jnp.pad(bias, (0, n_pad - n)).reshape(1, n_pad)    # (1, N_pad)
    return w_t, b_row


def _default_tile_b(batch, sublane):
    # Cap at 512 rows: ~16 MiB of double-buffered VMEM, safe on every
    # generation (incl. v7x's 64 MiB physical / 32 MiB scoped VMEM).  When the
    # batch is large enough, also cap so the grid has >= 2 steps, letting the
    # "parallel" batch axis shard across v7x's two TensorCores.
    cap = 512
    if batch >= 2 * sublane:
        cap = min(cap, _round_up(pl.cdiv(batch, 2), sublane))
    return max(sublane, min(cap, _round_up(batch, sublane)))


def mlp_forward(x_nchw, w_t, b_row, *, out_features=100, tile_b=None):
    """Forward pass of MLP: flatten + Linear(3*32*32 -> out_features).

    x_nchw: (B, 3, 32, 32); w_t: (K, N_pad) and b_row: (1, N_pad) from
    prepare_params().  Returns (B, out_features)."""
    batch = x_nchw.shape[0]
    x_flat = x_nchw.reshape(batch, -1)          # == torch x.view(x.size(0), -1)
    k, n_pad = w_t.shape
    assert x_flat.shape[1] == k, (x_flat.shape, w_t.shape)

    sublane = 16 if x_flat.dtype == jnp.bfloat16 else 8
    if tile_b is None:
        tile_b = _default_tile_b(batch, sublane)
    tile_b = max(sublane, _round_up(tile_b, sublane))

    # Ragged last block instead of padding x: rows are independent and the
    # out-of-range portion of the last tile is never written to the output.
    grid = (pl.cdiv(batch, tile_b),)

    out = pl.pallas_call(
        linear_kernel,
        out_shape=jax.ShapeDtypeStruct((batch, n_pad), x_flat.dtype),
        grid_spec=pl.GridSpec(
            grid=grid,
            in_specs=[
                # x tile streams over the batch; weight/bias stay VMEM-resident
                # across all grid steps (constant index_map -> DMA'd once).
                pl.BlockSpec((tile_b, k), lambda i: (i, 0)),
                pl.BlockSpec((k, n_pad), lambda i: (0, 0)),
                pl.BlockSpec((1, n_pad), lambda i: (0, 0)),
            ],
            out_specs=pl.BlockSpec((tile_b, n_pad), lambda i: (i, 0)),
        ),
        compiler_params=pltpu.CompilerParams(
            dimension_semantics=("parallel",),      # shard batch steps across TCs (v7x)
            vmem_limit_bytes=32 * 1024 * 1024,      # v5e default is 16 MiB; 32 is safe everywhere
        ),
    )(x_flat, w_t, b_row)

    # Drop the zero padded lanes (100 real out-features).
    return out[:, :out_features]


def init_params(key, in_features=3 * 32 * 32, out_features=100):
    # Deterministic init mimicking nn.Linear default: U(-1/sqrt(fan_in), +1/sqrt(fan_in))
    kw, kb = jax.random.split(key)
    bound = 1.0 / jnp.sqrt(jnp.float32(in_features))
    weight = jax.random.uniform(
        kw, (out_features, in_features), jnp.float32, -bound, bound)
    bias = jax.random.uniform(
        kb, (out_features,), jnp.float32, -bound, bound)
    return weight, bias


if __name__ == "__main__":
    key = jax.random.PRNGKey(0)
    kx, kp = jax.random.split(key)

    weight, bias = init_params(kp)
    # Hoisted out of the per-call path: weights are static, prep them once.
    w_t, b_row = prepare_params(weight, bias)

    # CIFAR-sized input (the module hardcodes 3*32*32 input features), small batch.
    B = 2
    x = jax.random.normal(kx, (B, 3, 32, 32), jnp.float32)
    out = jax.block_until_ready(mlp_forward(x, w_t, b_row, out_features=weight.shape[0]))
    ref = x.reshape(B, -1) @ weight.T + bias
    assert out.shape == (B, 100)
    assert jnp.allclose(out, ref, atol=1e-4, rtol=1e-4)

    # Also exercise the multi-step grid with a ragged last block (no x padding).
    B2 = 20
    x2 = jax.random.normal(kx, (B2, 3, 32, 32), jnp.float32)
    out2 = jax.block_until_ready(mlp_forward(x2, w_t, b_row, out_features=weight.shape[0]))
    ref2 = x2.reshape(B2, -1) @ weight.T + bias
    assert out2.shape == (B2, 100)
    assert jnp.allclose(out2, ref2, atol=1e-4, rtol=1e-4)

    print("KERNEL_OK")
</pallas_src>

<mosaic_0001>
module attributes {stable_mosaic.version = 11 : i64} {
  func.func @linear_kernel(%arg0: i32, %arg1: memref<8x3072xf32, #tpu.memory_space<vmem>>, %arg2: memref<3072x128xf32, #tpu.memory_space<vmem>>, %arg3: memref<1x128xf32, #tpu.memory_space<vmem>>, %arg4: memref<8x128xf32, #tpu.memory_space<vmem>>) attributes {dimension_semantics = [#tpu.dimension_semantics<parallel>], iteration_bounds = array<i64: 1>, scalar_prefetch = 0 : i64, scratch_operands = 0 : i64, tpu.core_type = #tpu.core_type<tc>, window_params = [{transform_indices = @transform_0, window_bounds = array<i64: 8, 3072>}, {pipeline_mode = #tpu.pipeline_mode<synchronous>, transform_indices = @transform_1, window_bounds = array<i64: 3072, 128>}, {pipeline_mode = #tpu.pipeline_mode<synchronous>, transform_indices = @transform_2, window_bounds = array<i64: 1, 128>}, {transform_indices = @transform_3, window_bounds = array<i64: 8, 128>}]} {
    %c0 = arith.constant 0 : index
    %c0_0 = arith.constant 0 : index
    %0 = vector.load %arg1[%c0, %c0_0] : memref<8x3072xf32, #tpu.memory_space<vmem>>, vector<8x3072xf32>
    %c0_1 = arith.constant 0 : index
    %c0_2 = arith.constant 0 : index
    %1 = vector.load %arg2[%c0_1, %c0_2] : memref<3072x128xf32, #tpu.memory_space<vmem>>, vector<3072x128xf32>
    %cst = arith.constant dense<0.000000e+00> : vector<8x128xf32>
    %2 = tpu.matmul %0, %1, %cst {dimension_numbers = #tpu.dot_dimension_numbers<[1], [0], [0], [1], [0, 0, 1, 1], [], []>} : vector<8x3072xf32>, vector<3072x128xf32>, vector<8x128xf32> -> vector<8x128xf32>
    %c0_3 = arith.constant 0 : index
    %c0_4 = arith.constant 0 : index
    %3 = vector.load %arg3[%c0_3, %c0_4] : memref<1x128xf32, #tpu.memory_space<vmem>>, vector<1x128xf32>
    %4 = vector.broadcast %3 : vector<1x128xf32> to vector<8x128xf32>
    %5 = arith.addf %2, %4 : vector<8x128xf32>
    %c0_5 = arith.constant 0 : index
    %c0_6 = arith.constant 0 : index
    %6 = vector.load %arg4[%c0_5, %c0_6] : memref<8x128xf32, #tpu.memory_space<vmem>>, vector<8x128xf32>
    tpu.vector_store %arg4[%c0_5, %c0_6], %5 {strides = array<i32>} : memref<8x128xf32, #tpu.memory_space<vmem>>, vector<8x128xf32>,
    return
  }
  func.func @transform_0(%arg0: i32) -> (i32, i32) {
    %c0_i32 = arith.constant 0 : i32
    %c0_i32_0 = arith.constant 0 : i32
    return %arg0, %c0_i32 : i32, i32
  }
  func.func @transform_1(%arg0: i32) -> (i32, i32) {
    %c0_i32 = arith.constant 0 : i32
    %c0_i32_0 = arith.constant 0 : i32
    %c0_i32_1 = arith.constant 0 : i32
    return %c0_i32, %c0_i32_0 : i32, i32
  }
  func.func @transform_2(%arg0: i32) -> (i32, i32) {
    %c0_i32 = arith.constant 0 : i32
    %c0_i32_0 = arith.constant 0 : i32
    %c0_i32_1 = arith.constant 0 : i32
    return %c0_i32, %c0_i32_0 : i32, i32
  }
  func.func @transform_3(%arg0: i32) -> (i32, i32) {
    %c0_i32 = arith.constant 0 : i32
    %c0_i32_0 = arith.constant 0 : i32
    return %arg0, %c0_i32 : i32, i32
  }
}

</mosaic_0001>

<llo_original>
// kernel: tpu_custom_call.1
$region0: #{tpu_custom_call.1}
  #allocation0 [shape = 'u32[]', space=smem, size = 0x4, offset = 0x4, fixed_abs, tag = 'smem constant byte address 0x4 - core index']
  #allocation1 [shape = 'u32[144,128]{1,0:T(1,128)}', space=vmem, size = 0x12000, scoped, tag = 'internal scratch']
  %s0 = inlined_call_operand.hbm [shape: f32[2,3072], index: 0, kind: input, shape index: {}]
  %s1 = inlined_call_operand.hbm [shape: f32[3072,128], index: 1, kind: input, shape index: {}]
  %s2 = inlined_call_operand.hbm [shape: f32[1,128], index: 2, kind: input, shape index: {}]
  %s3 = inlined_call_operand.hbm [shape: f32[2,128], index: 3, kind: output, shape index: {}]
  %s4 = sld [smem:[#allocation0]]
  $region34: #{tpu_custom_call.1} parent=0
    _
  %s6 = ssub.s32 1, %s4
  %s7 = scalar_select 0, %s6, %s4
  $region1: #{tpu_custom_call.1} parent=0
    #allocation2 [shape = 'u8[98304]{0}', space=vmem, size = 0x18000, scoped, tag = 'input window, operand 0, single buffered']
    #allocation3 [shape = 's32[1]{0}', space=sflag, size = 0x4, scoped, tag = 'scoped memory for tpu_custom_call.1']
    #allocation4 [shape = 's32[1]{0}', space=sflag, size = 0x4, scoped, tag = 'scoped memory for tpu_custom_call.1']
    #allocation5 [shape = 'u8[1572864]{0}', space=vmem, size = 0x180000, scoped, tag = 'input window, operand 1, single buffered']
    #allocation6 [shape = 's32[1]{0}', space=sflag, size = 0x4, scoped, tag = 'scoped memory for tpu_custom_call.1']
    #allocation7 [shape = 'u8[512]{0}', space=vmem, size = 0x400, scoped, tag = 'input window, operand 2, single buffered']
    #allocation8 [shape = 'u8[4096]{0}', space=vmem, size = 0x1000, scoped, tag = 'output window, operand 0, single buffered']
    %8 = vsyncpa [#allocation3], 0
    %9 = vsyncpa [#allocation6], 0
    %10 = vsyncpa [#allocation4], 0
    // Predicated region
    $region2: #{tpu_custom_call.1} parent=1 // pred_check
      _
    $region3: #{tpu_custom_call.1} parent=1 // pred_check_branch
      %12 = sbr.rel (0) target = $region5
    $region4: #{tpu_custom_call.1} parent=1 // pred_region
      %s14 = ssub.s32 3072, 768
      %15 = vsyncadd [#allocation3], %s14
      %s16 = sshll.u32 [#allocation2], 4
      %s17 = int_to_ptr.vmem [resolvable:$true] %s16
      %22 = dma.hbm_to_vmem [thread:$0]  %s0, 768, %s17, [#allocation3], 768, 768, 48
    $region5: #{tpu_custom_call.1} parent=1 // pred_fallthru
      _
    // Predicated region
    $region6: #{tpu_custom_call.1} parent=1 // pred_check
      _
    $region7: #{tpu_custom_call.1} parent=1 // pred_check_branch
      %24 = sbr.rel (0) target = $region9
    $region8: #{tpu_custom_call.1} parent=1 // pred_region
      %s26 = ssub.s32 49152, 49152
      %27 = vsyncadd [#allocation6], %s26
      %s28 = sshll.u32 [#allocation5], 4
      %s29 = int_to_ptr.vmem [resolvable:$true] %s28
      %34 = dma.hbm_to_vmem [thread:$0]  %s1, 49152, %s29, [#allocation6], 128, 128, 8
    $region9: #{tpu_custom_call.1} parent=1 // pred_fallthru
      _
    // Predicated region
    $region10: #{tpu_custom_call.1} parent=1 // pred_check
      _
    $region11: #{tpu_custom_call.1} parent=1 // pred_check_branch
      %36 = sbr.rel (0) target = $region13
    $region12: #{tpu_custom_call.1} parent=1 // pred_region
      %s38 = ssub.s32 16, 16
      %39 = vsyncadd [#allocation6], %s38
      %s41 = sshll.u32 [#allocation7], 4
      %s42 = int_to_ptr.vmem [resolvable:$true] %s41
      %44 = dma.hbm_to_vmem [thread:$0]  %s2, 16, %s42, [#allocation6]
    $region13: #{tpu_custom_call.1} parent=1 // pred_fallthru
      _
    // Predicated region
    $region14: #{tpu_custom_call.1} parent=1 // pred_check
      _
    $region15: #{tpu_custom_call.1} parent=1 // pred_check_branch
      %46 = sbr.rel (0) target = $region17
    $region16: #{tpu_custom_call.1} parent=1 // pred_region
      %47 = dma.done [#allocation3], 3072
    $region17: #{tpu_custom_call.1} parent=1 // pred_fallthru
      _
    // Predicated region
    $region18: #{tpu_custom_call.1} parent=1 // pred_check
      _
    $region19: #{tpu_custom_call.1} parent=1 // pred_check_branch
      %49 = sbr.rel (0) target = $region21
    $region20: #{tpu_custom_call.1} parent=1 // pred_region
      %50 = dma.done [#allocation6], 49152
    $region21: #{tpu_custom_call.1} parent=1 // pred_fallthru
      _
    // Predicated region
    $region22: #{tpu_custom_call.1} parent=1 // pred_check
      _
    $region23: #{tpu_custom_call.1} parent=1 // pred_check_branch
      %52 = sbr.rel (0) target = $region25
    $region24: #{tpu_custom_call.1} parent=1 // pred_region
      %53 = dma.done [#allocation6], 16
    $region25: #{tpu_custom_call.1} parent=1 // pred_fallthru
      _
    %v54 = vld [vmem:[#allocation2] sm:$0xff]
    %v55 = vld [vmem:[#allocation2 + $0x8] sm:$0xff]
    %v56 = vld [vmem:[#allocation2 + $0x10] sm:$0xff]
    %v57 = vld [vmem:[#allocation2 + $0x18] sm:$0xff]
    %v58 = vld [vmem:[#allocation2 + $0x20] sm:$0xff]
    %v59 = vld [vmem:[#allocation2 + $0x28] sm:$0xff]
    %v60 = vld [vmem:[#allocation2 + $0x30] sm:$0xff]
    %v61 = vld [vmem:[#allocation2 + $0x38] sm:$0xff]
    %v62 = vld [vmem:[#allocation2 + $0x40] sm:$0xff]
    %v63 = vld [vmem:[#allocation2 + $0x48] sm:$0xff]
    %v64 = vld [vmem:[#allocation2 + $0x50] sm:$0xff]
    %v65 = vld [vmem:[#allocation2 + $0x58] sm:$0xff]
    %v66 = vld [vmem:[#allocation2 + $0x60] sm:$0xff]
    %v67 = vld [vmem:[#allocation2 + $0x68] sm:$0xff]
    %v68 = vld [vmem:[#allocation2 + $0x70] sm:$0xff]
    %v69 = vld [vmem:[#allocation2 + $0x78] sm:$0xff]
    %v70 = vld [vmem:[#allocation2 + $0x80] sm:$0xff]
    %v71 = vld [vmem:[#allocation2 + $0x88] sm:$0xff]
    %v72 = vld [vmem:[#allocation2 + $0x90] sm:$0xff]
    %v73 = vld [vmem:[#allocation2 + $0x98] sm:$0xff]
    %v74 = vld [vmem:[#allocation2 + $0xa0] sm:$0xff]
    %v75 = vld [vmem:[#allocation2 + $0xa8] sm:$0xff]
    %v76 = vld [vmem:[#allocation2 + $0xb0] sm:$0xff]
    %v77 = vld [vmem:[#allocation2 + $0xb8] sm:$0xff]
    %v78 = vld [vmem:[#allocation5] sm:$0xff]
    %v79 = vld [vmem:[#allocation5 + $0x8] sm:$0xff]
    %v80 = vld [vmem:[#allocation5 + $0x10] sm:$0xff]
    %v81 = vld [vmem:[#allocation5 + $0x18] sm:$0xff]
    %v82 = vld [vmem:[#allocation5 + $0x20] sm:$0xff]
    %v83 = vld [vmem:[#allocation5 + $0x28] sm:$0xff]
    %v84 = vld [vmem:[#allocation5 + $0x30] sm:$0xff]
    %v85 = vld [vmem:[#allocation5 + $0x38] sm:$0xff]
    %v86 = vld [vmem:[#allocation5 + $0x40] sm:$0xff]
    %v87 = vld [vmem:[#allocation5 + $0x48] sm:$0xff]
    %v88 = vld [vmem:[#allocation5 + $0x50] sm:$0xff]
    %v89 = vld [vmem:[#allocation5 + $0x58] sm:$0xff]
    %v90 = vld [vmem:[#allocation5 + $0x60] sm:$0xff]
    %v91 = vld [vmem:[#allocation5 + $0x68] sm:$0xff]
    %v92 = vld [vmem:[#allocation5 + $0x70] sm:$0xff]
    %v93 = vld [vmem:[#allocation5 + $0x78] sm:$0xff]
    %v94 = vld [vmem:[#allocation5 + $0x80] sm:$0xff]
    %v95 = vld [vmem:[#allocation5 + $0x88] sm:$0xff]
    %v96 = vld [vmem:[#allocation5 + $0x90] sm:$0xff]
    %v97 = vld [vmem:[#allocation5 + $0x98] sm:$0xff]
    %v98 = vld [vmem:[#allocation5 + $0xa0] sm:$0xff]
    %v99 = vld [vmem:[#allocation5 + $0xa8] sm:$0xff]
    %v100 = vld [vmem:[#allocation5 + $0xb0] sm:$0xff]
    %v101 = vld [vmem:[#allocation5 + $0xb8] sm:$0xff]
    %v102 = vld [vmem:[#allocation5 + $0xc0] sm:$0xff]
    %v103 = vld [vmem:[#allocation5 + $0xc8] sm:$0xff]
    %v104 = vld [vmem:[#allocation5 + $0xd0] sm:$0xff]
    %v105 = vld [vmem:[#allocation5 + $0xd8] sm:$0xff]
    %v106 = vld [vmem:[#allocation5 + $0xe0] sm:$0xff]
    %v107 = vld [vmem:[#allocation5 + $0xe8] sm:$0xff]
    %v108 = vld [vmem:[#allocation5 + $0xf0] sm:$0xff]
    %v109 = vld [vmem:[#allocation5 + $0xf8] sm:$0xff]
    %v110 = vld [vmem:[#allocation5 + $0x100] sm:$0xff]
    %v111 = vld [vmem:[#allocation5 + $0x108] sm:$0xff]
    %v112 = vld [vmem:[#allocation5 + $0x110] sm:$0xff]
    %v113 = vld [vmem:[#allocation5 + $0x118] sm:$0xff]
    %v114 = vld [vmem:[#allocation5 + $0x120] sm:$0xff]
    %v115 = vld [vmem:[#allocation5 + $0x128] sm:$0xff]
    %v116 = vld [vmem:[#allocation5 + $0x130] sm:$0xff]
    %v117 = vld [vmem:[#allocation5 + $0x138] sm:$0xff]
    %v118 = vld [vmem:[#allocation5 + $0x140] sm:$0xff]
    %v119 = vld [vmem:[#allocation5 + $0x148] sm:$0xff]
    %v120 = vld [vmem:[#allocation5 + $0x150] sm:$0xff]
    %v121 = vld [vmem:[#allocation5 + $0x158] sm:$0xff]
    %v122 = vld [vmem:[#allocation5 + $0x160] sm:$0xff]
    %v123 = vld [vmem:[#allocation5 + $0x168] sm:$0xff]
    %v124 = vld [vmem:[#allocation5 + $0x170] sm:$0xff]
    %v125 = vld [vmem:[#allocation5 + $0x178] sm:$0xff]
    %v126 = vld [vmem:[#allocation5 + $0x180] sm:$0xff]
    %v127 = vld [vmem:[#allocation5 + $0x188] sm:$0xff]
    %v128 = vld [vmem:[#allocation5 + $0x190] sm:$0xff]
    %v129 = vld [vmem:[#allocation5 + $0x198] sm:$0xff]
    %v130 = vld [vmem:[#allocation5 + $0x1a0] sm:$0xff]
    %v131 = vld [vmem:[#allocation5 + $0x1a8] sm:$0xff]
    %v132 = vld [vmem:[#allocation5 + $0x1b0] sm:$0xff]
    %v133 = vld [vmem:[#allocation5 + $0x1b8] sm:$0xff]
    %v134 = vld [vmem:[#allocation5 + $0x1c0] sm:$0xff]
    %v135 = vld [vmem:[#allocation5 + $0x1c8] sm:$0xff]
    %v136 = vld [vmem:[#allocation5 + $0x1d0] sm:$0xff]
    %v137 = vld [vmem:[#allocation5 + $0x1d8] sm:$0xff]
    %v138 = vld [vmem:[#allocation5 + $0x1e0] sm:$0xff]
    %v139 = vld [vmem:[#allocation5 + $0x1e8] sm:$0xff]
    %v140 = vld [vmem:[#allocation5 + $0x1f0] sm:$0xff]
    %v141 = vld [vmem:[#allocation5 + $0x1f8] sm:$0xff]
    %v142 = vld [vmem:[#allocation5 + $0x200] sm:$0xff]
    %v143 = vld [vmem:[#allocation5 + $0x208] sm:$0xff]
    %v144 = vld [vmem:[#allocation5 + $0x210] sm:$0xff]
    %v145 = vld [vmem:[#allocation5 + $0x218] sm:$0xff]
    %v146 = vld [vmem:[#allocation5 + $0x220] sm:$0xff]
    %v147 = vld [vmem:[#allocation5 + $0x228] sm:$0xff]
    %v148 = vld [vmem:[#allocation5 + $0x230] sm:$0xff]
    %v149 = vld [vmem:[#allocation5 + $0x238] sm:$0xff]
    %v150 = vld [vmem:[#allocation5 + $0x240] sm:$0xff]
    %v151 = vld [vmem:[#allocation5 + $0x248] sm:$0xff]
    %v152 = vld [vmem:[#allocation5 + $0x250] sm:$0xff]
    %v153 = vld [vmem:[#allocation5 + $0x258] sm:$0xff]
    %v154 = vld [vmem:[#allocation5 + $0x260] sm:$0xff]
    %v155 = vld [vmem:[#allocation5 + $0x268] sm:$0xff]
    %v156 = vld [vmem:[#allocation5 + $0x270] sm:$0xff]
    %v157 = vld [vmem:[#allocation5 + $0x278] sm:$0xff]
    %v158 = vld [vmem:[#allocation5 + $0x280] sm:$0xff]
    %v159 = vld [vmem:[#allocation5 + $0x288] sm:$0xff]
    %v160 = vld [vmem:[#allocation5 + $0x290] sm:$0xff]
    %v161 = vld [vmem:[#allocation5 + $0x298] sm:$0xff]
    %v162 = vld [vmem:[#allocation5 + $0x2a0] sm:$0xff]
    %v163 = vld [vmem:[#allocation5 + $0x2a8] sm:$0xff]
    %v164 = vld [vmem:[#allocation5 + $0x2b0] sm:$0xff]
    %v165 = vld [vmem:[#allocation5 + $0x2b8] sm:$0xff]
    %v166 = vld [vmem:[#allocation5 + $0x2c0] sm:$0xff]
    %v167 = vld [vmem:[#allocation5 + $0x2c8] sm:$0xff]
    %v168 = vld [vmem:[#allocation5 + $0x2d0] sm:$0xff]
    %v169 = vld [vmem:[#allocation5 + $0x2d8] sm:$0xff]
    %v170 = vld [vmem:[#allocation5 + $0x2e0] sm:$0xff]
    %v171 = vld [vmem:[#allocation5 + $0x2e8] sm:$0xff]
    %v172 = vld [vmem:[#allocation5 + $0x2f0] sm:$0xff]
    %v173 = vld [vmem:[#allocation5 + $0x2f8] sm:$0xff]
    %v174 = vld [vmem:[#allocation5 + $0x300] sm:$0xff]
    %v175 = vld [vmem:[#allocation5 + $0x308] sm:$0xff]
    %v176 = vld [vmem:[#allocation5 + $0x310] sm:$0xff]
    %v177 = vld [vmem:[#allocation5 + $0x318] sm:$0xff]
    %v178 = vld [vmem:[#allocation5 + $0x320] sm:$0xff]
    %v179 = vld [vmem:[#allocation5 + $0x328] sm:$0xff]
    %v180 = vld [vmem:[#allocation5 + $0x330] sm:$0xff]
    %v181 = vld [vmem:[#allocation5 + $0x338] sm:$0xff]
    %v182 = vld [vmem:[#allocation5 + $0x340] sm:$0xff]
    %v183 = vld [vmem:[#allocation5 + $0x348] sm:$0xff]
    %v184 = vld [vmem:[#allocation5 + $0x350] sm:$0xff]
    %v185 = vld [vmem:[#allocation5 + $0x358] sm:$0xff]
    %v186 = vld [vmem:[#allocation5 + $0x360] sm:$0xff]
    %v187 = vld [vmem:[#allocation5 + $0x368] sm:$0xff]
    %v188 = vld [vmem:[#allocation5 + $0x370] sm:$0xff]
    %v189 = vld [vmem:[#allocation5 + $0x378] sm:$0xff]
    %v190 = vld [vmem:[#allocation5 + $0x380] sm:$0xff]
    %v191 = vld [vmem:[#allocation5 + $0x388] sm:$0xff]
    %v192 = vld [vmem:[#allocation5 + $0x390] sm:$0xff]
    %v193 = vld [vmem:[#allocation5 + $0x398] sm:$0xff]
    %v194 = vld [vmem:[#allocation5 + $0x3a0] sm:$0xff]
    %v195 = vld [vmem:[#allocation5 + $0x3a8] sm:$0xff]
    %v196 = vld [vmem:[#allocation5 + $0x3b0] sm:$0xff]
    %v197 = vld [vmem:[#allocation5 + $0x3b8] sm:$0xff]
    %v198 = vld [vmem:[#allocation5 + $0x3c0] sm:$0xff]
    %v199 = vld [vmem:[#allocation5 + $0x3c8] sm:$0xff]
    %v200 = vld [vmem:[#allocation5 + $0x3d0] sm:$0xff]
    %v201 = vld [vmem:[#allocation5 + $0x3d8] sm:$0xff]
    %v202 = vld [vmem:[#allocation5 + $0x3e0] sm:$0xff]
    %v203 = vld [vmem:[#allocation5 + $0x3e8] sm:$0xff]
    %v204 = vld [vmem:[#allocation5 + $0x3f0] sm:$0xff]
    %v205 = vld [vmem:[#allocation5 + $0x3f8] sm:$0xff]
    %v206 = vld [vmem:[#allocation5 + $0x400] sm:$0xff]
    %v207 = vld [vmem:[#allocation5 + $0x408] sm:$0xff]
    %v208 = vld [vmem:[#allocation5 + $0x410] sm:$0xff]
    %v209 = vld [vmem:[#allocation5 + $0x418] sm:$0xff]
    %v210 = vld [vmem:[#allocation5 + $0x420] sm:$0xff]
    %v211 = vld [vmem:[#allocation5 + $0x428] sm:$0xff]
    %v212 = vld [vmem:[#allocation5 + $0x430] sm:$0xff]
    %v213 = vld [vmem:[#allocation5 + $0x438] sm:$0xff]
    %v214 = vld [vmem:[#allocation5 + $0x440] sm:$0xff]
    %v215 = vld [vmem:[#allocation5 + $0x448] sm:$0xff]
    %v216 = vld [vmem:[#allocation5 + $0x450] sm:$0xff]
    %v217 = vld [vmem:[#allocation5 + $0x458] sm:$0xff]
    %v218 = vld [vmem:[#allocation5 + $0x460] sm:$0xff]
    %v219 = vld [vmem:[#allocation5 + $0x468] sm:$0xff]
    %v220 = vld [vmem:[#allocation5 + $0x470] sm:$0xff]
    %v221 = vld [vmem:[#allocation5 + $0x478] sm:$0xff]
    %v222 = vld [vmem:[#allocation5 + $0x480] sm:$0xff]
    %v223 = vld [vmem:[#allocation5 + $0x488] sm:$0xff]
    %v224 = vld [vmem:[#allocation5 + $0x490] sm:$0xff]
    %v225 = vld [vmem:[#allocation5 + $0x498] sm:$0xff]
    %v226 = vld [vmem:[#allocation5 + $0x4a0] sm:$0xff]
    %v227 = vld [vmem:[#allocation5 + $0x4a8] sm:$0xff]
    %v228 = vld [vmem:[#allocation5 + $0x4b0] sm:$0xff]
    %v229 = vld [vmem:[#allocation5 + $0x4b8] sm:$0xff]
    %v230 = vld [vmem:[#allocation5 + $0x4c0] sm:$0xff]
    %v231 = vld [vmem:[#allocation5 + $0x4c8] sm:$0xff]
    %v232 = vld [vmem:[#allocation5 + $0x4d0] sm:$0xff]
    %v233 = vld [vmem:[#allocation5 + $0x4d8] sm:$0xff]
    %v234 = vld [vmem:[#allocation5 + $0x4e0] sm:$0xff]
    %v235 = vld [vmem:[#allocation5 + $0x4e8] sm:$0xff]
    %v236 = vld [vmem:[#allocation5 + $0x4f0] sm:$0xff]
    %v237 = vld [vmem:[#allocation5 + $0x4f8] sm:$0xff]
    %v238 = vld [vmem:[#allocation5 + $0x500] sm:$0xff]
    %v239 = vld [vmem:[#allocation5 + $0x508] sm:$0xff]
    %v240 = vld [vmem:[#allocation5 + $0x510] sm:$0xff]
    %v241 = vld [vmem:[#allocation5 + $0x518] sm:$0xff]
    %v242 = vld [vmem:[#allocation5 + $0x520] sm:$0xff]
    %v243 = vld [vmem:[#allocation5 + $0x528] sm:$0xff]
    %v244 = vld [vmem:[#allocation5 + $0x530] sm:$0xff]
    %v245 = vld [vmem:[#allocation5 + $0x538] sm:$0xff]
    %v246 = vld [vmem:[#allocation5 + $0x540] sm:$0xff]
    %v247 = vld [vmem:[#allocation5 + $0x548] sm:$0xff]
    %v248 = vld [vmem:[#allocation5 + $0x550] sm:$0xff]
    %v249 = vld [vmem:[#allocation5 + $0x558] sm:$0xff]
    %v250 = vld [vmem:[#allocation5 + $0x560] sm:$0xff]
    %v251 = vld [vmem:[#allocation5 + $0x568] sm:$0xff]
    %v252 = vld [vmem:[#allocation5 + $0x570] sm:$0xff]
    %v253 = vld [vmem:[#allocation5 + $0x578] sm:$0xff]
    %v254 = vld [vmem:[#allocation5 + $0x580] sm:$0xff]
    %v255 = vld [vmem:[#allocation5 + $0x588] sm:$0xff]
    %v256 = vld [vmem:[#allocation5 + $0x590] sm:$0xff]
    %v257 = vld [vmem:[#allocation5 + $0x598] sm:$0xff]
    %v258 = vld [vmem:[#allocation5 + $0x5a0] sm:$0xff]
    %v259 = vld [vmem:[#allocation5 + $0x5a8] sm:$0xff]
    %v260 = vld [vmem:[#allocation5 + $0x5b0] sm:$0xff]
    %v261 = vld [vmem:[#allocation5 + $0x5b8] sm:$0xff]
    %v262 = vld [vmem:[#allocation5 + $0x5c0] sm:$0xff]
    %v263 = vld [vmem:[#allocation5 + $0x5c8] sm:$0xff]
    %v264 = vld [vmem:[#allocation5 + $0x5d0] sm:$0xff]
    %v265 = vld [vmem:[#allocation5 + $0x5d8] sm:$0xff]
    %v266 = vld [vmem:[#allocation5 + $0x5e0] sm:$0xff]
    %v267 = vld [vmem:[#allocation5 + $0x5e8] sm:$0xff]
    %v268 = vld [vmem:[#allocation5 + $0x5f0] sm:$0xff]
    %v269 = vld [vmem:[#allocation5 + $0x5f8] sm:$0xff]
    %v270 = vld [vmem:[#allocation5 + $0x600] sm:$0xff]
    %v271 = vld [vmem:[#allocation5 + $0x608] sm:$0xff]
    %v272 = vld [vmem:[#allocation5 + $0x610] sm:$0xff]
    %v273 = vld [vmem:[#allocation5 + $0x618] sm:$0xff]
    %v274 = vld [vmem:[#allocation5 + $0x620] sm:$0xff]
    %v275 = vld [vmem:[#allocation5 + $0x628] sm:$0xff]
    %v276 = vld [vmem:[#allocation5 + $0x630] sm:$0xff]
    %v277 = vld [vmem:[#allocation5 + $0x638] sm:$0xff]
    %v278 = vld [vmem:[#allocation5 + $0x640] sm:$0xff]
    %v279 = vld [vmem:[#allocation5 + $0x648] sm:$0xff]
    %v280 = vld [vmem:[#allocation5 + $0x650] sm:$0xff]
    %v281 = vld [vmem:[#allocation5 + $0x658] sm:$0xff]
    %v282 = vld [vmem:[#allocation5 + $0x660] sm:$0xff]
    %v283 = vld [vmem:[#allocation5 + $0x668] sm:$0xff]
    %v284 = vld [vmem:[#allocation5 + $0x670] sm:$0xff]
    %v285 = vld [vmem:[#allocation5 + $0x678] sm:$0xff]
    %v286 = vld [vmem:[#allocation5 + $0x680] sm:$0xff]
    %v287 = vld [vmem:[#allocation5 + $0x688] sm:$0xff]
    %v288 = vld [vmem:[#allocation5 + $0x690] sm:$0xff]
    %v289 = vld [vmem:[#allocation5 + $0x698] sm:$0xff]
    %v290 = vld [vmem:[#allocation5 + $0x6a0] sm:$0xff]
    %v291 = vld [vmem:[#allocation5 + $0x6a8] sm:$0xff]
    %v292 = vld [vmem:[#allocation5 + $0x6b0] sm:$0xff]
    %v293 = vld [vmem:[#allocation5 + $0x6b8] sm:$0xff]
    %v294 = vld [vmem:[#allocation5 + $0x6c0] sm:$0xff]
    %v295 = vld [vmem:[#allocation5 + $0x6c8] sm:$0xff]
    %v296 = vld [vmem:[#allocation5 + $0x6d0] sm:$0xff]
    %v297 = vld [vmem:[#allocation5 + $0x6d8] sm:$0xff]
    %v298 = vld [vmem:[#allocation5 + $0x6e0] sm:$0xff]
    %v299 = vld [vmem:[#allocation5 + $0x6e8] sm:$0xff]
    %v300 = vld [vmem:[#allocation5 + $0x6f0] sm:$0xff]
    %v301 = vld [vmem:[#allocation5 + $0x6f8] sm:$0xff]
    %v302 = vld [vmem:[#allocation5 + $0x700] sm:$0xff]
    %v303 = vld [vmem:[#allocation5 + $0x708] sm:$0xff]
    %v304 = vld [vmem:[#allocation5 + $0x710] sm:$0xff]
    %v305 = vld [vmem:[#allocation5 + $0x718] sm:$0xff]
    %v306 = vld [vmem:[#allocation5 + $0x720] sm:$0xff]
    %v307 = vld [vmem:[#allocation5 + $0x728] sm:$0xff]
    %v308 = vld [vmem:[#allocation5 + $0x730] sm:$0xff]
    %v309 = vld [vmem:[#allocation5 + $0x738] sm:$0xff]
    %v310 = vld [vmem:[#allocation5 + $0x740] sm:$0xff]
    %v311 = vld [vmem:[#allocation5 + $0x748] sm:$0xff]
    %v312 = vld [vmem:[#allocation5 + $0x750] sm:$0xff]
    %v313 = vld [vmem:[#allocation5 + $0x758] sm:$0xff]
    %v314 = vld [vmem:[#allocation5 + $0x760] sm:$0xff]
    %v315 = vld [vmem:[#allocation5 + $0x768] sm:$0xff]
    %v316 = vld [vmem:[#allocation5 + $0x770] sm:$0xff]
    %v317 = vld [vmem:[#allocation5 + $0x778] sm:$0xff]
    %v318 = vld [vmem:[#allocation5 + $0x780] sm:$0xff]
    %v319 = vld [vmem:[#allocation5 + $0x788] sm:$0xff]
    %v320 = vld [vmem:[#allocation5 + $0x790] sm:$0xff]
    %v321 = vld [vmem:[#allocation5 + $0x798] sm:$0xff]
    %v322 = vld [vmem:[#allocation5 + $0x7a0] sm:$0xff]
    %v323 = vld [vmem:[#allocation5 + $0x7a8] sm:$0xff]
    %v324 = vld [vmem:[#allocation5 + $0x7b0] sm:$0xff]
    %v325 = vld [vmem:[#allocation5 + $0x7b8] sm:$0xff]
    %v326 = vld [vmem:[#allocation5 + $0x7c0] sm:$0xff]
    %v327 = vld [vmem:[#allocation5 + $0x7c8] sm:$0xff]
    %v328 = vld [vmem:[#allocation5 + $0x7d0] sm:$0xff]
    %v329 = vld [vmem:[#allocation5 + $0x7d8] sm:$0xff]
    %v330 = vld [vmem:[#allocation5 + $0x7e0] sm:$0xff]
    %v331 = vld [vmem:[#allocation5 + $0x7e8] sm:$0xff]
    %v332 = vld [vmem:[#allocation5 + $0x7f0] sm:$0xff]
    %v333 = vld [vmem:[#allocation5 + $0x7f8] sm:$0xff]
    %v334 = vld [vmem:[#allocation5 + $0x800] sm:$0xff]
    %v335 = vld [vmem:[#allocation5 + $0x808] sm:$0xff]
    %v336 = vld [vmem:[#allocation5 + $0x810] sm:$0xff]
    %v337 = vld [vmem:[#allocation5 + $0x818] sm:$0xff]
    %v338 = vld [vmem:[#allocation5 + $0x820] sm:$0xff]
    %v339 = vld [vmem:[#allocation5 + $0x828] sm:$0xff]
    %v340 = vld [vmem:[#allocation5 + $0x830] sm:$0xff]
    %v341 = vld [vmem:[#allocation5 + $0x838] sm:$0xff]
    %v342 = vld [vmem:[#allocation5 + $0x840] sm:$0xff]
    %v343 = vld [vmem:[#allocation5 + $0x848] sm:$0xff]
    %v344 = vld [vmem:[#allocation5 + $0x850] sm:$0xff]
    %v345 = vld [vmem:[#allocation5 + $0x858] sm:$0xff]
    %v346 = vld [vmem:[#allocation5 + $0x860] sm:$0xff]
    %v347 = vld [vmem:[#allocation5 + $0x868] sm:$0xff]
    %v348 = vld [vmem:[#allocation5 + $0x870] sm:$0xff]
    %v349 = vld [vmem:[#allocation5 + $0x878] sm:$0xff]
    %v350 = vld [vmem:[#allocation5 + $0x880] sm:$0xff]
    %v351 = vld [vmem:[#allocation5 + $0x888] sm:$0xff]
    %v352 = vld [vmem:[#allocation5 + $0x890] sm:$0xff]
    %v353 = vld [vmem:[#allocation5 + $0x898] sm:$0xff]
    %v354 = vld [vmem:[#allocation5 + $0x8a0] sm:$0xff]
    %v355 = vld [vmem:[#allocation5 + $0x8a8] sm:$0xff]
    %v356 = vld [vmem:[#allocation5 + $0x8b0] sm:$0xff]
    %v357 = vld [vmem:[#allocation5 + $0x8b8] sm:$0xff]
    %v358 = vld [vmem:[#allocation5 + $0x8c0] sm:$0xff]
    %v359 = vld [vmem:[#allocation5 + $0x8c8] sm:$0xff]
    %v360 = vld [vmem:[#allocation5 + $0x8d0] sm:$0xff]
    %v361 = vld [vmem:[#allocation5 + $0x8d8] sm:$0xff]
    %v362 = vld [vmem:[#allocation5 + $0x8e0] sm:$0xff]
    %v363 = vld [vmem:[#allocation5 + $0x8e8] sm:$0xff]
    %v364 = vld [vmem:[#allocation5 + $0x8f0] sm:$0xff]
    %v365 = vld [vmem:[#allocation5 + $0x8f8] sm:$0xff]
    %v366 = vld [vmem:[#allocation5 + $0x900] sm:$0xff]
    %v367 = vld [vmem:[#allocation5 + $0x908] sm:$0xff]
    %v368 = vld [vmem:[#allocation5 + $0x910] sm:$0xff]
    %v369 = vld [vmem:[#allocation5 + $0x918] sm:$0xff]
    %v370 = vld [vmem:[#allocation5 + $0x920] sm:$0xff]
    %v371 = vld [vmem:[#allocation5 + $0x928] sm:$0xff]
    %v372 = vld [vmem:[#allocation5 + $0x930] sm:$0xff]
    %v373 = vld [vmem:[#allocation5 + $0x938] sm:$0xff]
    %v374 = vld [vmem:[#allocation5 + $0x940] sm:$0xff]
    %v375 = vld [vmem:[#allocation5 + $0x948] sm:$0xff]
    %v376 = vld [vmem:[#allocation5 + $0x950] sm:$0xff]
    %v377 = vld [vmem:[#allocation5 + $0x958] sm:$0xff]
    %v378 = vld [vmem:[#allocation5 + $0x960] sm:$0xff]
    %v379 = vld [vmem:[#allocation5 + $0x968] sm:$0xff]
    %v380 = vld [vmem:[#allocation5 + $0x970] sm:$0xff]
    %v381 = vld [vmem:[#allocation5 + $0x978] sm:$0xff]
    %v382 = vld [vmem:[#allocation5 + $0x980] sm:$0xff]
    %v383 = vld [vmem:[#allocation5 + $0x988] sm:$0xff]
    %v384 = vld [vmem:[#allocation5 + $0x990] sm:$0xff]
    %v385 = vld [vmem:[#allocation5 + $0x998] sm:$0xff]
    %v386 = vld [vmem:[#allocation5 + $0x9a0] sm:$0xff]
    %v387 = vld [vmem:[#allocation5 + $0x9a8] sm:$0xff]
    %v388 = vld [vmem:[#allocation5 + $0x9b0] sm:$0xff]
    %v389 = vld [vmem:[#allocation5 + $0x9b8] sm:$0xff]
    %v390 = vld [vmem:[#allocation5 + $0x9c0] sm:$0xff]
    %v391 = vld [vmem:[#allocation5 + $0x9c8] sm:$0xff]
    %v392 = vld [vmem:[#allocation5 + $0x9d0] sm:$0xff]
    %v393 = vld [vmem:[#allocation5 + $0x9d8] sm:$0xff]
    %v394 = vld [vmem:[#allocation5 + $0x9e0] sm:$0xff]
    %v395 = vld [vmem:[#allocation5 + $0x9e8] sm:$0xff]
    %v396 = vld [vmem:[#allocation5 + $0x9f0] sm:$0xff]
    %v397 = vld [vmem:[#allocation5 + $0x9f8] sm:$0xff]
    %v398 = vld [vmem:[#allocation5 + $0xa00] sm:$0xff]
    %v399 = vld [vmem:[#allocation5 + $0xa08] sm:$0xff]
    %v400 = vld [vmem:[#allocation5 + $0xa10] sm:$0xff]
    %v401 = vld [vmem:[#allocation5 + $0xa18] sm:$0xff]
    %v402 = vld [vmem:[#allocation5 + $0xa20] sm:$0xff]
    %v403 = vld [vmem:[#allocation5 + $0xa28] sm:$0xff]
    %v404 = vld [vmem:[#allocation5 + $0xa30] sm:$0xff]
    %v405 = vld [vmem:[#allocation5 + $0xa38] sm:$0xff]
    %v406 = vld [vmem:[#allocation5 + $0xa40] sm:$0xff]
    %v407 = vld [vmem:[#allocation5 + $0xa48] sm:$0xff]
    %v408 = vld [vmem:[#allocation5 + $0xa50] sm:$0xff]
    %v409 = vld [vmem:[#allocation5 + $0xa58] sm:$0xff]
    %v410 = vld [vmem:[#allocation5 + $0xa60] sm:$0xff]
    %v411 = vld [vmem:[#allocation5 + $0xa68] sm:$0xff]
    %v412 = vld [vmem:[#allocation5 + $0xa70] sm:$0xff]
    %v413 = vld [vmem:[#allocation5 + $0xa78] sm:$0xff]
    %v414 = vld [vmem:[#allocation5 + $0xa80] sm:$0xff]
    %v415 = vld [vmem:[#allocation5 + $0xa88] sm:$0xff]
    %v416 = vld [vmem:[#allocation5 + $0xa90] sm:$0xff]
    %v417 = vld [vmem:[#allocation5 + $0xa98] sm:$0xff]
    %v418 = vld [vmem:[#allocation5 + $0xaa0] sm:$0xff]
    %v419 = vld [vmem:[#allocation5 + $0xaa8] sm:$0xff]
    %v420 = vld [vmem:[#allocation5 + $0xab0] sm:$0xff]
    %v421 = vld [vmem:[#allocation5 + $0xab8] sm:$0xff]
    %v422 = vld [vmem:[#allocation5 + $0xac0] sm:$0xff]
    %v423 = vld [vmem:[#allocation5 + $0xac8] sm:$0xff]
    %v424 = vld [vmem:[#allocation5 + $0xad0] sm:$0xff]
    %v425 = vld [vmem:[#allocation5 + $0xad8] sm:$0xff]
    %v426 = vld [vmem:[#allocation5 + $0xae0] sm:$0xff]
    %v427 = vld [vmem:[#allocation5 + $0xae8] sm:$0xff]
    %v428 = vld [vmem:[#allocation5 + $0xaf0] sm:$0xff]
    %v429 = vld [vmem:[#allocation5 + $0xaf8] sm:$0xff]
    %v430 = vld [vmem:[#allocation5 + $0xb00] sm:$0xff]
    %v431 = vld [vmem:[#allocation5 + $0xb08] sm:$0xff]
    %v432 = vld [vmem:[#allocation5 + $0xb10] sm:$0xff]
    %v433 = vld [vmem:[#allocation5 + $0xb18] sm:$0xff]
    %v434 = vld [vmem:[#allocation5 + $0xb20] sm:$0xff]
    %v435 = vld [vmem:[#allocation5 + $0xb28] sm:$0xff]
    %v436 = vld [vmem:[#allocation5 + $0xb30] sm:$0xff]
    %v437 = vld [vmem:[#allocation5 + $0xb38] sm:$0xff]
    %v438 = vld [vmem:[#allocation5 + $0xb40] sm:$0xff]
    %v439 = vld [vmem:[#allocation5 + $0xb48] sm:$0xff]
    %v440 = vld [vmem:[#allocation5 + $0xb50] sm:$0xff]
    %v441 = vld [vmem:[#allocation5 + $0xb58] sm:$0xff]
    %v442 = vld [vmem:[#allocation5 + $0xb60] sm:$0xff]
    %v443 = vld [vmem:[#allocation5 + $0xb68] sm:$0xff]
    %v444 = vld [vmem:[#allocation5 + $0xb70] sm:$0xff]
    %v445 = vld [vmem:[#allocation5 + $0xb78] sm:$0xff]
    %v446 = vld [vmem:[#allocation5 + $0xb80] sm:$0xff]
    %v447 = vld [vmem:[#allocation5 + $0xb88] sm:$0xff]
    %v448 = vld [vmem:[#allocation5 + $0xb90] sm:$0xff]
    %v449 = vld [vmem:[#allocation5 + $0xb98] sm:$0xff]
    %v450 = vld [vmem:[#allocation5 + $0xba0] sm:$0xff]
    %v451 = vld [vmem:[#allocation5 + $0xba8] sm:$0xff]
    %v452 = vld [vmem:[#allocation5 + $0xbb0] sm:$0xff]
    %v453 = vld [vmem:[#allocation5 + $0xbb8] sm:$0xff]
    %v454 = vld [vmem:[#allocation5 + $0xbc0] sm:$0xff]
    %v455 = vld [vmem:[#allocation5 + $0xbc8] sm:$0xff]
    %v456 = vld [vmem:[#allocation5 + $0xbd0] sm:$0xff]
    %v457 = vld [vmem:[#allocation5 + $0xbd8] sm:$0xff]
    %v458 = vld [vmem:[#allocation5 + $0xbe0] sm:$0xff]
    %v459 = vld [vmem:[#allocation5 + $0xbe8] sm:$0xff]
    %v460 = vld [vmem:[#allocation5 + $0xbf0] sm:$0xff]
    %v461 = vld [vmem:[#allocation5 + $0xbf8] sm:$0xff]
    %v462 = vld [vmem:[#allocation7] sm:$0x1]
    %v464 = vlaneseq
    %v465 = vshrl.u32 %v464, 7
    %v466 = vsub.s32 0, %v465
    %v467 = vrot.slane %v462, %v466
    %v493 = vcombine.low %v54, %v60
    %v494 = vcombine.high %v54, %v60
    %v495 = vcombine.low %v66, %v72
    %v496 = vcombine.high %v66, %v72
    %v498 = vunpack.c.l.s4 1983009808
    %v499 = vunpack.c.0.s8 %v498
    %v500 = vlaneseq
    %v501 = vshrl.u32 %v500, 7
    %v502 = vsub.s32 %v499, %v501
    %v503 = vrot.slane %v493, %v502
    %v505 = vunpack.c.l.s4 1983009808
    %v506 = vunpack.c.0.s8 %v505
    %v507 = vlaneseq
    %v508 = vshrl.u32 %v507, 7
    %v509 = vsub.s32 %v506, %v508
    %v510 = vrot.slane %v494, %v509
    %v512 = vunpack.c.l.s4 1983009808
    %v513 = vunpack.c.0.s8 %v512
    %v514 = vlaneseq
    %v515 = vshrl.u32 %v514, 7
    %v516 = vsub.s32 %v513, %v515
    %v517 = vrot.slane %v495, %v516
    %v519 = vunpack.c.l.s4 1983009808
    %v520 = vunpack.c.0.s8 %v519
    %v521 = vlaneseq
    %v522 = vshrl.u32 %v521, 7
    %v523 = vsub.s32 %v520, %v522
    %v524 = vrot.slane %v496, %v523
    %v525 = vcombine.low %v503, %v517
    %v526 = vcombine.high %v503, %v517
    %v527 = vcombine.low %v510, %v524
    %v528 = vcombine.high %v510, %v524
    %v529 = vcombine.low %v55, %v61
    %v530 = vcombine.high %v55, %v61
    %v531 = vcombine.low %v67, %v73
    %v532 = vcombine.high %v67, %v73
    %v534 = vunpack.c.l.s4 1983009808
    %v535 = vunpack.c.0.s8 %v534
    %v536 = vlaneseq
    %v537 = vshrl.u32 %v536, 7
    %v538 = vsub.s32 %v535, %v537
    %v539 = vrot.slane %v529, %v538
    %v541 = vunpack.c.l.s4 1983009808
    %v542 = vunpack.c.0.s8 %v541
    %v543 = vlaneseq
    %v544 = vshrl.u32 %v543, 7
    %v545 = vsub.s32 %v542, %v544
    %v546 = vrot.slane %v530, %v545
    %v548 = vunpack.c.l.s4 1983009808
    %v549 = vunpack.c.0.s8 %v548
    %v550 = vlaneseq
    %v551 = vshrl.u32 %v550, 7
    %v552 = vsub.s32 %v549, %v551
    %v553 = vrot.slane %v531, %v552
    %v555 = vunpack.c.l.s4 1983009808
    %v556 = vunpack.c.0.s8 %v555
    %v557 = vlaneseq
    %v558 = vshrl.u32 %v557, 7
    %v559 = vsub.s32 %v556, %v558
    %v560 = vrot.slane %v532, %v559
    %v561 = vcombine.low %v539, %v553
    %v562 = vcombine.high %v539, %v553
    %v563 = vcombine.low %v546, %v560
    %v564 = vcombine.high %v546, %v560
    %v565 = vcombine.low %v56, %v62
    %v566 = vcombine.high %v56, %v62
    %v567 = vcombine.low %v68, %v74
    %v568 = vcombine.high %v68, %v74
    %v570 = vunpack.c.l.s4 1983009808
    %v571 = vunpack.c.0.s8 %v570
    %v572 = vlaneseq
    %v573 = vshrl.u32 %v572, 7
    %v574 = vsub.s32 %v571, %v573
    %v575 = vrot.slane %v565, %v574
    %v577 = vunpack.c.l.s4 1983009808
    %v578 = vunpack.c.0.s8 %v577
    %v579 = vlaneseq
    %v580 = vshrl.u32 %v579, 7
    %v581 = vsub.s32 %v578, %v580
    %v582 = vrot.slane %v566, %v581
    %v584 = vunpack.c.l.s4 1983009808
    %v585 = vunpack.c.0.s8 %v584
    %v586 = vlaneseq
    %v587 = vshrl.u32 %v586, 7
    %v588 = vsub.s32 %v585, %v587
    %v589 = vrot.slane %v567, %v588
    %v591 = vunpack.c.l.s4 1983009808
    %v592 = vunpack.c.0.s8 %v591
    %v593 = vlaneseq
    %v594 = vshrl.u32 %v593, 7
    %v595 = vsub.s32 %v592, %v594
    %v596 = vrot.slane %v568, %v595
    %v597 = vcombine.low %v575, %v589
    %v598 = vcombine.high %v575, %v589
    %v599 = vcombine.low %v582, %v596
    %v600 = vcombine.high %v582, %v596
    %v601 = vcombine.low %v57, %v63
    %v602 = vcombine.high %v57, %v63
    %v603 = vcombine.low %v69, %v75
    %v604 = vcombine.high %v69, %v75
    %v606 = vunpack.c.l.s4 1983009808
    %v607 = vunpack.c.0.s8 %v606
    %v608 = vlaneseq
    %v609 = vshrl.u32 %v608, 7
    %v610 = vsub.s32 %v607, %v609
    %v611 = vrot.slane %v601, %v610
    %v613 = vunpack.c.l.s4 1983009808
    %v614 = vunpack.c.0.s8 %v613
    %v615 = vlaneseq
    %v616 = vshrl.u32 %v615, 7
    %v617 = vsub.s32 %v614, %v616
    %v618 = vrot.slane %v602, %v617
    %v620 = vunpack.c.l.s4 1983009808
    %v621 = vunpack.c.0.s8 %v620
    %v622 = vlaneseq
    %v623 = vshrl.u32 %v622, 7
    %v624 = vsub.s32 %v621, %v623
    %v625 = vrot.slane %v603, %v624
    %v627 = vunpack.c.l.s4 1983009808
    %v628 = vunpack.c.0.s8 %v627
    %v629 = vlaneseq
    %v630 = vshrl.u32 %v629, 7
    %v631 = vsub.s32 %v628, %v630
    %v632 = vrot.slane %v604, %v631
    %v633 = vcombine.low %v611, %v625
    %v634 = vcombine.high %v611, %v625
    %v635 = vcombine.low %v618, %v632
    %v636 = vcombine.high %v618, %v632
    %v637 = vcombine.low %v58, %v64
    %v638 = vcombine.high %v58, %v64
    %v639 = vcombine.low %v70, %v76
    %v640 = vcombine.high %v70, %v76
    %v642 = vunpack.c.l.s4 1983009808
    %v643 = vunpack.c.0.s8 %v642
    %v644 = vlaneseq
    %v645 = vshrl.u32 %v644, 7
    %v646 = vsub.s32 %v643, %v645
    %v647 = vrot.slane %v637, %v646
    %v649 = vunpack.c.l.s4 1983009808
    %v650 = vunpack.c.0.s8 %v649
    %v651 = vlaneseq
    %v652 = vshrl.u32 %v651, 7
    %v653 = vsub.s32 %v650, %v652
    %v654 = vrot.slane %v638, %v653
    %v656 = vunpack.c.l.s4 1983009808
    %v657 = vunpack.c.0.s8 %v656
    %v658 = vlaneseq
    %v659 = vshrl.u32 %v658, 7
    %v660 = vsub.s32 %v657, %v659
    %v661 = vrot.slane %v639, %v660
    %v663 = vunpack.c.l.s4 1983009808
    %v664 = vunpack.c.0.s8 %v663
    %v665 = vlaneseq
    %v666 = vshrl.u32 %v665, 7
    %v667 = vsub.s32 %v664, %v666
    %v668 = vrot.slane %v640, %v667
    %v669 = vcombine.low %v647, %v661
    %v670 = vcombine.high %v647, %v661
    %v671 = vcombine.low %v654, %v668
    %v672 = vcombine.high %v654, %v668
    %v673 = vcombine.low %v59, %v65
    %v674 = vcombine.high %v59, %v65
    %v675 = vcombine.low %v71, %v77
    %v676 = vcombine.high %v71, %v77
    %v678 = vunpack.c.l.s4 1983009808
    %v679 = vunpack.c.0.s8 %v678
    %v680 = vlaneseq
    %v681 = vshrl.u32 %v680, 7
    %v682 = vsub.s32 %v679, %v681
    %v683 = vrot.slane %v673, %v682
    %v685 = vunpack.c.l.s4 1983009808
    %v686 = vunpack.c.0.s8 %v685
    %v687 = vlaneseq
    %v688 = vshrl.u32 %v687, 7
    %v689 = vsub.s32 %v686, %v688
    %v690 = vrot.slane %v674, %v689
    %v692 = vunpack.c.l.s4 1983009808
    %v693 = vunpack.c.0.s8 %v692
    %v694 = vlaneseq
    %v695 = vshrl.u32 %v694, 7
    %v696 = vsub.s32 %v693, %v695
    %v697 = vrot.slane %v675, %v696
    %v699 = vunpack.c.l.s4 1983009808
    %v700 = vunpack.c.0.s8 %v699
    %v701 = vlaneseq
    %v702 = vshrl.u32 %v701, 7
    %v703 = vsub.s32 %v700, %v702
    %v704 = vrot.slane %v676, %v703
    %v705 = vcombine.low %v683, %v697
    %v706 = vcombine.high %v683, %v697
    %v707 = vcombine.low %v690, %v704
    %v708 = vcombine.high %v690, %v704
    %733 = vmatprep.subr.mxu0 0.0
    %734 = vmatpush1.msra.mxu0 %v93
    %735 = vmatprep.subr.mxu0 0.0
    %736 = vmatpush1.msra.mxu0 %v92
    %737 = vmatprep.subr.mxu0 0.0
    %738 = vmatpush1.msra.mxu0 %v91
    %739 = vmatprep.subr.mxu0 0.0
    %740 = vmatpush1.msra.mxu0 %v90
    %741 = vmatprep.subr.mxu0 0.0
    %742 = vmatpush1.msra.mxu0 %v89
    %743 = vmatprep.subr.mxu0 0.0
    %744 = vmatpush1.msra.mxu0 %v88
    %745 = vmatprep.subr.mxu0 0.0
    %746 = vmatpush1.msra.mxu0 %v87
    %747 = vmatprep.subr.mxu0 0.0
    %748 = vmatpush1.msra.mxu0 %v86
    %749 = vmatprep.subr.mxu0 0.0
    %750 = vmatpush1.msra.mxu0 %v85
    %751 = vmatprep.subr.mxu0 0.0
    %752 = vmatpush1.msra.mxu0 %v84
    %753 = vmatprep.subr.mxu0 0.0
    %754 = vmatpush1.msra.mxu0 %v83
    %755 = vmatprep.subr.mxu0 0.0
    %756 = vmatpush1.msra.mxu0 %v82
    %757 = vmatprep.subr.mxu0 0.0
    %758 = vmatpush1.msra.mxu0 %v81
    %759 = vmatprep.subr.mxu0 0.0
    %760 = vmatpush1.msra.mxu0 %v80
    %761 = vmatprep.subr.mxu0 0.0
    %762 = vmatpush1.msra.mxu0 %v79
    %763 = vmatprep.subr.mxu0 0.0
    %764 = vmatpush1.msra.mxu0 %v78
    %765 = vmatprep.subr.mxu0 0.0
    %766 = vmatpush2.msra.mxu0 %v109
    %767 = vmatprep.subr.mxu0 0.0
    %768 = vmatpush2.msra.mxu0 %v108
    %769 = vmatprep.subr.mxu0 0.0
    %770 = vmatpush2.msra.mxu0 %v107
    %771 = vmatprep.subr.mxu0 0.0
    %772 = vmatpush2.msra.mxu0 %v106
    %773 = vmatprep.subr.mxu0 0.0
    %774 = vmatpush2.msra.mxu0 %v105
    %775 = vmatprep.subr.mxu0 0.0
    %776 = vmatpush2.msra.mxu0 %v104
    %777 = vmatprep.subr.mxu0 0.0
    %778 = vmatpush2.msra.mxu0 %v103
    %779 = vmatprep.subr.mxu0 0.0
    %780 = vmatpush2.msra.mxu0 %v102
    %781 = vmatprep.subr.mxu0 0.0
    %782 = vmatpush2.msra.mxu0 %v101
    %783 = vmatprep.subr.mxu0 0.0
    %784 = vmatpush2.msra.mxu0 %v100
    %785 = vmatprep.subr.mxu0 0.0
    %786 = vmatpush2.msra.mxu0 %v99
    %787 = vmatprep.subr.mxu0 0.0
    %788 = vmatpush2.msra.mxu0 %v98
    %789 = vmatprep.subr.mxu0 0.0
    %790 = vmatpush2.msra.mxu0 %v97
    %791 = vmatprep.subr.mxu0 0.0
    %792 = vmatpush2.msra.mxu0 %v96
    %793 = vmatprep.subr.mxu0 0.0
    %794 = vmatpush2.msra.mxu0 %v95
    %795 = vmatprep.subr.mxu0 0.0
    %796 = vmatpush2.msra.mxu0 %v94
    %797 = vmatprep.mubr.f32.mxu0 %v526
    %798 = vmatmul.mubr.f32.gmra.mxu0 %v525
    %v799 = vpop.f32.mrf.mxu0
    %v800 = vadd.f32 %v467, %v799
    %v801 = vpop.f32.mrf.mxu0
    %802 = vdwg.mxu0
    %803 = vmatprep.subr.mxu0 0.0
    %804 = vmatpush1.msra.mxu0 %v125
    %805 = vmatprep.subr.mxu0 0.0
    %806 = vmatpush1.msra.mxu0 %v124
    %807 = vmatprep.subr.mxu0 0.0
    %808 = vmatpush1.msra.mxu0 %v123
    %809 = vmatprep.subr.mxu0 0.0
    %810 = vmatpush1.msra.mxu0 %v122
    %811 = vmatprep.subr.mxu0 0.0
    %812 = vmatpush1.msra.mxu0 %v121
    %813 = vmatprep.subr.mxu0 0.0
    %814 = vmatpush1.msra.mxu0 %v120
    %815 = vmatprep.subr.mxu0 0.0
    %816 = vmatpush1.msra.mxu0 %v119
    %817 = vmatprep.subr.mxu0 0.0
    %818 = vmatpush1.msra.mxu0 %v118
    %819 = vmatprep.subr.mxu0 0.0
    %820 = vmatpush1.msra.mxu0 %v117
    %821 = vmatprep.subr.mxu0 0.0
    %822 = vmatpush1.msra.mxu0 %v116
    %823 = vmatprep.subr.mxu0 0.0
    %824 = vmatpush1.msra.mxu0 %v115
    %825 = vmatprep.subr.mxu0 0.0
    %826 = vmatpush1.msra.mxu0 %v114
    %827 = vmatprep.subr.mxu0 0.0
    %828 = vmatpush1.msra.mxu0 %v113
    %829 = vmatprep.subr.mxu0 0.0
    %830 = vmatpush1.msra.mxu0 %v112
    %831 = vmatprep.subr.mxu0 0.0
    %832 = vmatpush1.msra.mxu0 %v111
    %833 = vmatprep.subr.mxu0 0.0
    %834 = vmatpush1.msra.mxu0 %v110
    %835 = vmatprep.subr.mxu0 0.0
    %836 = vmatpush2.msra.mxu0 %v141
    %837 = vmatprep.subr.mxu0 0.0
    %838 = vmatpush2.msra.mxu0 %v140
    %839 = vmatprep.subr.mxu0 0.0
    %840 = vmatpush2.msra.mxu0 %v139
    %841 = vmatprep.subr.mxu0 0.0
    %842 = vmatpush2.msra.mxu0 %v138
    %843 = vmatprep.subr.mxu0 0.0
    %844 = vmatpush2.msra.mxu0 %v137
    %845 = vmatprep.subr.mxu0 0.0
    %846 = vmatpush2.msra.mxu0 %v136
    %847 = vmatprep.subr.mxu0 0.0
    %848 = vmatpush2.msra.mxu0 %v135
    %849 = vmatprep.subr.mxu0 0.0
    %850 = vmatpush2.msra.mxu0 %v134
    %851 = vmatprep.subr.mxu0 0.0
    %852 = vmatpush2.msra.mxu0 %v133
    %853 = vmatprep.subr.mxu0 0.0
    %854 = vmatpush2.msra.mxu0 %v132
    %855 = vmatprep.subr.mxu0 0.0
    %856 = vmatpush2.msra.mxu0 %v131
    %857 = vmatprep.subr.mxu0 0.0
    %858 = vmatpush2.msra.mxu0 %v130
    %859 = vmatprep.subr.mxu0 0.0
    %860 = vmatpush2.msra.mxu0 %v129
    %861 = vmatprep.subr.mxu0 0.0
    %862 = vmatpush2.msra.mxu0 %v128
    %863 = vmatprep.subr.mxu0 0.0
    %864 = vmatpush2.msra.mxu0 %v127
    %865 = vmatprep.subr.mxu0 0.0
    %866 = vmatpush2.msra.mxu0 %v126
    %867 = vmatprep.mubr.f32.mxu0 %v528
    %868 = vmatmul.mubr.f32.gmra.mxu0 %v527
    %v869 = vpop.f32.mrf.mxu0
    %v870 = vadd.f32 %v800, %v869
    %v871 = vpop.f32.mrf.mxu0
    %872 = vdwg.mxu0
    %873 = vmatprep.subr.mxu0 0.0
    %874 = vmatpush1.msra.mxu0 %v157
    %875 = vmatprep.subr.mxu0 0.0
    %876 = vmatpush1.msra.mxu0 %v156
    %877 = vmatprep.subr.mxu0 0.0
    %878 = vmatpush1.msra.mxu0 %v155
    %879 = vmatprep.subr.mxu0 0.0
    %880 = vmatpush1.msra.mxu0 %v154
    %881 = vmatprep.subr.mxu0 0.0
    %882 = vmatpush1.msra.mxu0 %v153
    %883 = vmatprep.subr.mxu0 0.0
    %884 = vmatpush1.msra.mxu0 %v152
    %885 = vmatprep.subr.mxu0 0.0
    %886 = vmatpush1.msra.mxu0 %v151
    %887 = vmatprep.subr.mxu0 0.0
    %888 = vmatpush1.msra.mxu0 %v150
    %889 = vmatprep.subr.mxu0 0.0
    %890 = vmatpush1.msra.mxu0 %v149
    %891 = vmatprep.subr.mxu0 0.0
    %892 = vmatpush1.msra.mxu0 %v148
    %893 = vmatprep.subr.mxu0 0.0
    %894 = vmatpush1.msra.mxu0 %v147
    %895 = vmatprep.subr.mxu0 0.0
    %896 = vmatpush1.msra.mxu0 %v146
    %897 = vmatprep.subr.mxu0 0.0
    %898 = vmatpush1.msra.mxu0 %v145
    %899 = vmatprep.subr.mxu0 0.0
    %900 = vmatpush1.msra.mxu0 %v144
    %901 = vmatprep.subr.mxu0 0.0
    %902 = vmatpush1.msra.mxu0 %v143
    %903 = vmatprep.subr.mxu0 0.0
    %904 = vmatpush1.msra.mxu0 %v142
    %905 = vmatprep.subr.mxu0 0.0
    %906 = vmatpush2.msra.mxu0 %v173
    %907 = vmatprep.subr.mxu0 0.0
    %908 = vmatpush2.msra.mxu0 %v172
    %909 = vmatprep.subr.mxu0 0.0
    %910 = vmatpush2.msra.mxu0 %v171
    %911 = vmatprep.subr.mxu0 0.0
    %912 = vmatpush2.msra.mxu0 %v170
    %913 = vmatprep.subr.mxu0 0.0
    %914 = vmatpush2.msra.mxu0 %v169
    %915 = vmatprep.subr.mxu0 0.0
    %916 = vmatpush2.msra.mxu0 %v168
    %917 = vmatprep.subr.mxu0 0.0
    %918 = vmatpush2.msra.mxu0 %v167
    %919 = vmatprep.subr.mxu0 0.0
    %920 = vmatpush2.msra.mxu0 %v166
    %921 = vmatprep.subr.mxu0 0.0
    %922 = vmatpush2.msra.mxu0 %v165
    %923 = vmatprep.subr.mxu0 0.0
    %924 = vmatpush2.msra.mxu0 %v164
    %925 = vmatprep.subr.mxu0 0.0
    %926 = vmatpush2.msra.mxu0 %v163
    %927 = vmatprep.subr.mxu0 0.0
    %928 = vmatpush2.msra.mxu0 %v162
    %929 = vmatprep.subr.mxu0 0.0
    %930 = vmatpush2.msra.mxu0 %v161
    %931 = vmatprep.subr.mxu0 0.0
    %932 = vmatpush2.msra.mxu0 %v160
    %933 = vmatprep.subr.mxu0 0.0
    %934 = vmatpush2.msra.mxu0 %v159
    %935 = vmatprep.subr.mxu0 0.0
    %936 = vmatpush2.msra.mxu0 %v158
    %937 = vmatprep.mubr.f32.mxu0 %v562
    %938 = vmatmul.mubr.f32.gmra.mxu0 %v561
    %v939 = vpop.f32.mrf.mxu0
    %v940 = vadd.f32 %v870, %v939
    %v941 = vpop.f32.mrf.mxu0
    %942 = vdwg.mxu0
    %943 = vmatprep.subr.mxu0 0.0
    %944 = vmatpush1.msra.mxu0 %v189
    %945 = vmatprep.subr.mxu0 0.0
    %946 = vmatpush1.msra.mxu0 %v188
    %947 = vmatprep.subr.mxu0 0.0
    %948 = vmatpush1.msra.mxu0 %v187
    %949 = vmatprep.subr.mxu0 0.0
    %950 = vmatpush1.msra.mxu0 %v186
    %951 = vmatprep.subr.mxu0 0.0
    %952 = vmatpush1.msra.mxu0 %v185
    %953 = vmatprep.subr.mxu0 0.0
    %954 = vmatpush1.msra.mxu0 %v184
    %955 = vmatprep.subr.mxu0 0.0
    %956 = vmatpush1.msra.mxu0 %v183
    %957 = vmatprep.subr.mxu0 0.0
    %958 = vmatpush1.msra.mxu0 %v182
    %959 = vmatprep.subr.mxu0 0.0
    %960 = vmatpush1.msra.mxu0 %v181
    %961 = vmatprep.subr.mxu0 0.0
    %962 = vmatpush1.msra.mxu0 %v180
    %963 = vmatprep.subr.mxu0 0.0
    %964 = vmatpush1.msra.mxu0 %v179
    %965 = vmatprep.subr.mxu0 0.0
    %966 = vmatpush1.msra.mxu0 %v178
    %967 = vmatprep.subr.mxu0 0.0
    %968 = vmatpush1.msra.mxu0 %v177
    %969 = vmatprep.subr.mxu0 0.0
    %970 = vmatpush1.msra.mxu0 %v176
    %971 = vmatprep.subr.mxu0 0.0
    %972 = vmatpush1.msra.mxu0 %v175
    %973 = vmatprep.subr.mxu0 0.0
    %974 = vmatpush1.msra.mxu0 %v174
    %975 = vmatprep.subr.mxu0 0.0
    %976 = vmatpush2.msra.mxu0 %v205
    %977 = vmatprep.subr.mxu0 0.0
    %978 = vmatpush2.msra.mxu0 %v204
    %979 = vmatprep.subr.mxu0 0.0
    %980 = vmatpush2.msra.mxu0 %v203
    %981 = vmatprep.subr.mxu0 0.0
    %982 = vmatpush2.msra.mxu0 %v202
    %983 = vmatprep.subr.mxu0 0.0
    %984 = vmatpush2.msra.mxu0 %v201
    %985 = vmatprep.subr.mxu0 0.0
    %986 = vmatpush2.msra.mxu0 %v200
    %987 = vmatprep.subr.mxu0 0.0
    %988 = vmatpush2.msra.mxu0 %v199
    %989 = vmatprep.subr.mxu0 0.0
    %990 = vmatpush2.msra.mxu0 %v198
    %991 = vmatprep.subr.mxu0 0.0
    %992 = vmatpush2.msra.mxu0 %v197
    %993 = vmatprep.subr.mxu0 0.0
    %994 = vmatpush2.msra.mxu0 %v196
    %995 = vmatprep.subr.mxu0 0.0
    %996 = vmatpush2.msra.mxu0 %v195
    %997 = vmatprep.subr.mxu0 0.0
    %998 = vmatpush2.msra.mxu0 %v194
    %999 = vmatprep.subr.mxu0 0.0
    %1000 = vmatpush2.msra.mxu0 %v193
    %1001 = vmatprep.subr.mxu0 0.0
    %1002 = vmatpush2.msra.mxu0 %v192
    %1003 = vmatprep.subr.mxu0 0.0
    %1004 = vmatpush2.msra.mxu0 %v191
    %1005 = vmatprep.subr.mxu0 0.0
    %1006 = vmatpush2.msra.mxu0 %v190
    %1007 = vmatprep.mubr.f32.mxu0 %v564
    %1008 = vmatmul.mubr.f32.gmra.mxu0 %v563
    %v1009 = vpop.f32.mrf.mxu0
    %v1010 = vadd.f32 %v940, %v1009
    %v1011 = vpop.f32.mrf.mxu0
    %1012 = vdwg.mxu0
    %1013 = vmatprep.subr.mxu0 0.0
    %1014 = vmatpush1.msra.mxu0 %v221
    %1015 = vmatprep.subr.mxu0 0.0
    %1016 = vmatpush1.msra.mxu0 %v220
    %1017 = vmatprep.subr.mxu0 0.0
    %1018 = vmatpush1.msra.mxu0 %v219
    %1019 = vmatprep.subr.mxu0 0.0
    %1020 = vmatpush1.msra.mxu0 %v218
    %1021 = vmatprep.subr.mxu0 0.0
    %1022 = vmatpush1.msra.mxu0 %v217
    %1023 = vmatprep.subr.mxu0 0.0
    %1024 = vmatpush1.msra.mxu0 %v216
    %1025 = vmatprep.subr.mxu0 0.0
    %1026 = vmatpush1.msra.mxu0 %v215
    %1027 = vmatprep.subr.mxu0 0.0
    %1028 = vmatpush1.msra.mxu0 %v214
    %1029 = vmatprep.subr.mxu0 0.0
    %1030 = vmatpush1.msra.mxu0 %v213
    %1031 = vmatprep.subr.mxu0 0.0
    %1032 = vmatpush1.msra.mxu0 %v212
    %1033 = vmatprep.subr.mxu0 0.0
    %1034 = vmatpush1.msra.mxu0 %v211
    %1035 = vmatprep.subr.mxu0 0.0
    %1036 = vmatpush1.msra.mxu0 %v210
    %1037 = vmatprep.subr.mxu0 0.0
    %1038 = vmatpush1.msra.mxu0 %v209
    %1039 = vmatprep.subr.mxu0 0.0
    %1040 = vmatpush1.msra.mxu0 %v208
    %1041 = vmatprep.subr.mxu0 0.0
    %1042 = vmatpush1.msra.mxu0 %v207
    %1043 = vmatprep.subr.mxu0 0.0
    %1044 = vmatpush1.msra.mxu0 %v206
    %1045 = vmatprep.subr.mxu0 0.0
    %1046 = vmatpush2.msra.mxu0 %v237
    %1047 = vmatprep.subr.mxu0 0.0
    %1048 = vmatpush2.msra.mxu0 %v236
    %1049 = vmatprep.subr.mxu0 0.0
    %1050 = vmatpush2.msra.mxu0 %v235
    %1051 = vmatprep.subr.mxu0 0.0
    %1052 = vmatpush2.msra.mxu0 %v234
    %1053 = vmatprep.subr.mxu0 0.0
    %1054 = vmatpush2.msra.mxu0 %v233
    %1055 = vmatprep.subr.mxu0 0.0
    %1056 = vmatpush2.msra.mxu0 %v232
    %1057 = vmatprep.subr.mxu0 0.0
    %1058 = vmatpush2.msra.mxu0 %v231
    %1059 = vmatprep.subr.mxu0 0.0
    %1060 = vmatpush2.msra.mxu0 %v230
    %1061 = vmatprep.subr.mxu0 0.0
    %1062 = vmatpush2.msra.mxu0 %v229
    %1063 = vmatprep.subr.mxu0 0.0
    %1064 = vmatpush2.msra.mxu0 %v228
    %1065 = vmatprep.subr.mxu0 0.0
    %1066 = vmatpush2.msra.mxu0 %v227
    %1067 = vmatprep.subr.mxu0 0.0
    %1068 = vmatpush2.msra.mxu0 %v226
    %1069 = vmatprep.subr.mxu0 0.0
    %1070 = vmatpush2.msra.mxu0 %v225
    %1071 = vmatprep.subr.mxu0 0.0
    %1072 = vmatpush2.msra.mxu0 %v224
    %1073 = vmatprep.subr.mxu0 0.0
    %1074 = vmatpush2.msra.mxu0 %v223
    %1075 = vmatprep.subr.mxu0 0.0
    %1076 = vmatpush2.msra.mxu0 %v222
    %1077 = vmatprep.mubr.f32.mxu0 %v598
    %1078 = vmatmul.mubr.f32.gmra.mxu0 %v597
    %v1079 = vpop.f32.mrf.mxu0
    %v1080 = vadd.f32 %v1010, %v1079
    %v1081 = vpop.f32.mrf.mxu0
    %1082 = vdwg.mxu0
    %1083 = vmatprep.subr.mxu0 0.0
    %1084 = vmatpush1.msra.mxu0 %v253
    %1085 = vmatprep.subr.mxu0 0.0
    %1086 = vmatpush1.msra.mxu0 %v252
    %1087 = vmatprep.subr.mxu0 0.0
    %1088 = vmatpush1.msra.mxu0 %v251
    %1089 = vmatprep.subr.mxu0 0.0
    %1090 = vmatpush1.msra.mxu0 %v250
    %1091 = vmatprep.subr.mxu0 0.0
    %1092 = vmatpush1.msra.mxu0 %v249
    %1093 = vmatprep.subr.mxu0 0.0
    %1094 = vmatpush1.msra.mxu0 %v248
    %1095 = vmatprep.subr.mxu0 0.0
    %1096 = vmatpush1.msra.mxu0 %v247
    %1097 = vmatprep.subr.mxu0 0.0
    %1098 = vmatpush1.msra.mxu0 %v246
    %1099 = vmatprep.subr.mxu0 0.0
    %1100 = vmatpush1.msra.mxu0 %v245
    %1101 = vmatprep.subr.mxu0 0.0
    %1102 = vmatpush1.msra.mxu0 %v244
    %1103 = vmatprep.subr.mxu0 0.0
    %1104 = vmatpush1.msra.mxu0 %v243
    %1105 = vmatprep.subr.mxu0 0.0
    %1106 = vmatpush1.msra.mxu0 %v242
    %1107 = vmatprep.subr.mxu0 0.0
    %1108 = vmatpush1.msra.mxu0 %v241
    %1109 = vmatprep.subr.mxu0 0.0
    %1110 = vmatpush1.msra.mxu0 %v240
    %1111 = vmatprep.subr.mxu0 0.0
    %1112 = vmatpush1.msra.mxu0 %v239
    %1113 = vmatprep.subr.mxu0 0.0
    %1114 = vmatpush1.msra.mxu0 %v238
    %1115 = vmatprep.subr.mxu0 0.0
    %1116 = vmatpush2.msra.mxu0 %v269
    %1117 = vmatprep.subr.mxu0 0.0
    %1118 = vmatpush2.msra.mxu0 %v268
    %1119 = vmatprep.subr.mxu0 0.0
    %1120 = vmatpush2.msra.mxu0 %v267
    %1121 = vmatprep.subr.mxu0 0.0
    %1122 = vmatpush2.msra.mxu0 %v266
    %1123 = vmatprep.subr.mxu0 0.0
    %1124 = vmatpush2.msra.mxu0 %v265
    %1125 = vmatprep.subr.mxu0 0.0
    %1126 = vmatpush2.msra.mxu0 %v264
    %1127 = vmatprep.subr.mxu0 0.0
    %1128 = vmatpush2.msra.mxu0 %v263
    %1129 = vmatprep.subr.mxu0 0.0
    %1130 = vmatpush2.msra.mxu0 %v262
    %1131 = vmatprep.subr.mxu0 0.0
    %1132 = vmatpush2.msra.mxu0 %v261
    %1133 = vmatprep.subr.mxu0 0.0
    %1134 = vmatpush2.msra.mxu0 %v260
    %1135 = vmatprep.subr.mxu0 0.0
    %1136 = vmatpush2.msra.mxu0 %v259
    %1137 = vmatprep.subr.mxu0 0.0
    %1138 = vmatpush2.msra.mxu0 %v258
    %1139 = vmatprep.subr.mxu0 0.0
    %1140 = vmatpush2.msra.mxu0 %v257
    %1141 = vmatprep.subr.mxu0 0.0
    %1142 = vmatpush2.msra.mxu0 %v256
    %1143 = vmatprep.subr.mxu0 0.0
    %1144 = vmatpush2.msra.mxu0 %v255
    %1145 = vmatprep.subr.mxu0 0.0
    %1146 = vmatpush2.msra.mxu0 %v254
    %1147 = vmatprep.mubr.f32.mxu0 %v600
    %1148 = vmatmul.mubr.f32.gmra.mxu0 %v599
    %v1149 = vpop.f32.mrf.mxu0
    %v1150 = vadd.f32 %v1080, %v1149
    %v1151 = vpop.f32.mrf.mxu0
    %1152 = vdwg.mxu0
    %1153 = vmatprep.subr.mxu0 0.0
    %1154 = vmatpush1.msra.mxu0 %v285
    %1155 = vmatprep.subr.mxu0 0.0
    %1156 = vmatpush1.msra.mxu0 %v284
    %1157 = vmatprep.subr.mxu0 0.0
    %1158 = vmatpush1.msra.mxu0 %v283
    %1159 = vmatprep.subr.mxu0 0.0
    %1160 = vmatpush1.msra.mxu0 %v282
    %1161 = vmatprep.subr.mxu0 0.0
    %1162 = vmatpush1.msra.mxu0 %v281
    %1163 = vmatprep.subr.mxu0 0.0
    %1164 = vmatpush1.msra.mxu0 %v280
    %1165 = vmatprep.subr.mxu0 0.0
    %1166 = vmatpush1.msra.mxu0 %v279
    %1167 = vmatprep.subr.mxu0 0.0
    %1168 = vmatpush1.msra.mxu0 %v278
    %1169 = vmatprep.subr.mxu0 0.0
    %1170 = vmatpush1.msra.mxu0 %v277
    %1171 = vmatprep.subr.mxu0 0.0
    %1172 = vmatpush1.msra.mxu0 %v276
    %1173 = vmatprep.subr.mxu0 0.0
    %1174 = vmatpush1.msra.mxu0 %v275
    %1175 = vmatprep.subr.mxu0 0.0
    %1176 = vmatpush1.msra.mxu0 %v274
    %1177 = vmatprep.subr.mxu0 0.0
    %1178 = vmatpush1.msra.mxu0 %v273
    %1179 = vmatprep.subr.mxu0 0.0
    %1180 = vmatpush1.msra.mxu0 %v272
    %1181 = vmatprep.subr.mxu0 0.0
    %1182 = vmatpush1.msra.mxu0 %v271
    %1183 = vmatprep.subr.mxu0 0.0
    %1184 = vmatpush1.msra.mxu0 %v270
    %1185 = vmatprep.subr.mxu0 0.0
    %1186 = vmatpush2.msra.mxu0 %v301
    %1187 = vmatprep.subr.mxu0 0.0
    %1188 = vmatpush2.msra.mxu0 %v300
    %1189 = vmatprep.subr.mxu0 0.0
    %1190 = vmatpush2.msra.mxu0 %v299
    %1191 = vmatprep.subr.mxu0 0.0
    %1192 = vmatpush2.msra.mxu0 %v298
    %1193 = vmatprep.subr.mxu0 0.0
    %1194 = vmatpush2.msra.mxu0 %v297
    %1195 = vmatprep.subr.mxu0 0.0
    %1196 = vmatpush2.msra.mxu0 %v296
    %1197 = vmatprep.subr.mxu0 0.0
    %1198 = vmatpush2.msra.mxu0 %v295
    %1199 = vmatprep.subr.mxu0 0.0
    %1200 = vmatpush2.msra.mxu0 %v294
    %1201 = vmatprep.subr.mxu0 0.0
    %1202 = vmatpush2.msra.mxu0 %v293
    %1203 = vmatprep.subr.mxu0 0.0
    %1204 = vmatpush2.msra.mxu0 %v292
    %1205 = vmatprep.subr.mxu0 0.0
    %1206 = vmatpush2.msra.mxu0 %v291
    %1207 = vmatprep.subr.mxu0 0.0
    %1208 = vmatpush2.msra.mxu0 %v290
    %1209 = vmatprep.subr.mxu0 0.0
    %1210 = vmatpush2.msra.mxu0 %v289
    %1211 = vmatprep.subr.mxu0 0.0
    %1212 = vmatpush2.msra.mxu0 %v288
    %1213 = vmatprep.subr.mxu0 0.0
    %1214 = vmatpush2.msra.mxu0 %v287
    %1215 = vmatprep.subr.mxu0 0.0
    %1216 = vmatpush2.msra.mxu0 %v286
    %1217 = vmatprep.mubr.f32.mxu0 %v634
    %1218 = vmatmul.mubr.f32.gmra.mxu0 %v633
    %v1219 = vpop.f32.mrf.mxu0
    %v1220 = vadd.f32 %v1150, %v1219
    %v1221 = vpop.f32.mrf.mxu0
    %1222 = vdwg.mxu0
    %1223 = vmatprep.subr.mxu0 0.0
    %1224 = vmatpush1.msra.mxu0 %v317
    %1225 = vmatprep.subr.mxu0 0.0
    %1226 = vmatpush1.msra.mxu0 %v316
    %1227 = vmatprep.subr.mxu0 0.0
    %1228 = vmatpush1.msra.mxu0 %v315
    %1229 = vmatprep.subr.mxu0 0.0
    %1230 = vmatpush1.msra.mxu0 %v314
    %1231 = vmatprep.subr.mxu0 0.0
    %1232 = vmatpush1.msra.mxu0 %v313
    %1233 = vmatprep.subr.mxu0 0.0
    %1234 = vmatpush1.msra.mxu0 %v312
    %1235 = vmatprep.subr.mxu0 0.0
    %1236 = vmatpush1.msra.mxu0 %v311
    %1237 = vmatprep.subr.mxu0 0.0
    %1238 = vmatpush1.msra.mxu0 %v310
    %1239 = vmatprep.subr.mxu0 0.0
    %1240 = vmatpush1.msra.mxu0 %v309
    %1241 = vmatprep.subr.mxu0 0.0
    %1242 = vmatpush1.msra.mxu0 %v308
    %1243 = vmatprep.subr.mxu0 0.0
    %1244 = vmatpush1.msra.mxu0 %v307
    %1245 = vmatprep.subr.mxu0 0.0
    %1246 = vmatpush1.msra.mxu0 %v306
    %1247 = vmatprep.subr.mxu0 0.0
    %1248 = vmatpush1.msra.mxu0 %v305
    %1249 = vmatprep.subr.mxu0 0.0
    %1250 = vmatpush1.msra.mxu0 %v304
    %1251 = vmatprep.subr.mxu0 0.0
    %1252 = vmatpush1.msra.mxu0 %v303
    %1253 = vmatprep.subr.mxu0 0.0
    %1254 = vmatpush1.msra.mxu0 %v302
    %1255 = vmatprep.subr.mxu0 0.0
    %1256 = vmatpush2.msra.mxu0 %v333
    %1257 = vmatprep.subr.mxu0 0.0
    %1258 = vmatpush2.msra.mxu0 %v332
    %1259 = vmatprep.subr.mxu0 0.0
    %1260 = vmatpush2.msra.mxu0 %v331
    %1261 = vmatprep.subr.mxu0 0.0
    %1262 = vmatpush2.msra.mxu0 %v330
    %1263 = vmatprep.subr.mxu0 0.0
    %1264 = vmatpush2.msra.mxu0 %v329
    %1265 = vmatprep.subr.mxu0 0.0
    %1266 = vmatpush2.msra.mxu0 %v328
    %1267 = vmatprep.subr.mxu0 0.0
    %1268 = vmatpush2.msra.mxu0 %v327
    %1269 = vmatprep.subr.mxu0 0.0
    %1270 = vmatpush2.msra.mxu0 %v326
    %1271 = vmatprep.subr.mxu0 0.0
    %1272 = vmatpush2.msra.mxu0 %v325
    %1273 = vmatprep.subr.mxu0 0.0
    %1274 = vmatpush2.msra.mxu0 %v324
    %1275 = vmatprep.subr.mxu0 0.0
    %1276 = vmatpush2.msra.mxu0 %v323
    %1277 = vmatprep.subr.mxu0 0.0
    %1278 = vmatpush2.msra.mxu0 %v322
    %1279 = vmatprep.subr.mxu0 0.0
    %1280 = vmatpush2.msra.mxu0 %v321
    %1281 = vmatprep.subr.mxu0 0.0
    %1282 = vmatpush2.msra.mxu0 %v320
    %1283 = vmatprep.subr.mxu0 0.0
    %1284 = vmatpush2.msra.mxu0 %v319
    %1285 = vmatprep.subr.mxu0 0.0
    %1286 = vmatpush2.msra.mxu0 %v318
    %1287 = vmatprep.mubr.f32.mxu0 %v636
    %1288 = vmatmul.mubr.f32.gmra.mxu0 %v635
    %v1289 = vpop.f32.mrf.mxu0
    %v1290 = vadd.f32 %v1220, %v1289
    %v1291 = vpop.f32.mrf.mxu0
    %1292 = vdwg.mxu0
    %1293 = vmatprep.subr.mxu0 0.0
    %1294 = vmatpush1.msra.mxu0 %v349
    %1295 = vmatprep.subr.mxu0 0.0
    %1296 = vmatpush1.msra.mxu0 %v348
    %1297 = vmatprep.subr.mxu0 0.0
    %1298 = vmatpush1.msra.mxu0 %v347
    %1299 = vmatprep.subr.mxu0 0.0
    %1300 = vmatpush1.msra.mxu0 %v346
    %1301 = vmatprep.subr.mxu0 0.0
    %1302 = vmatpush1.msra.mxu0 %v345
    %1303 = vmatprep.subr.mxu0 0.0
    %1304 = vmatpush1.msra.mxu0 %v344
    %1305 = vmatprep.subr.mxu0 0.0
    %1306 = vmatpush1.msra.mxu0 %v343
    %1307 = vmatprep.subr.mxu0 0.0
    %1308 = vmatpush1.msra.mxu0 %v342
    %1309 = vmatprep.subr.mxu0 0.0
    %1310 = vmatpush1.msra.mxu0 %v341
    %1311 = vmatprep.subr.mxu0 0.0
    %1312 = vmatpush1.msra.mxu0 %v340
    %1313 = vmatprep.subr.mxu0 0.0
    %1314 = vmatpush1.msra.mxu0 %v339
    %1315 = vmatprep.subr.mxu0 0.0
    %1316 = vmatpush1.msra.mxu0 %v338
    %1317 = vmatprep.subr.mxu0 0.0
    %1318 = vmatpush1.msra.mxu0 %v337
    %1319 = vmatprep.subr.mxu0 0.0
    %1320 = vmatpush1.msra.mxu0 %v336
    %1321 = vmatprep.subr.mxu0 0.0
    %1322 = vmatpush1.msra.mxu0 %v335
    %1323 = vmatprep.subr.mxu0 0.0
    %1324 = vmatpush1.msra.mxu0 %v334
    %1325 = vmatprep.subr.mxu0 0.0
    %1326 = vmatpush2.msra.mxu0 %v365
    %1327 = vmatprep.subr.mxu0 0.0
    %1328 = vmatpush2.msra.mxu0 %v364
    %1329 = vmatprep.subr.mxu0 0.0
    %1330 = vmatpush2.msra.mxu0 %v363
    %1331 = vmatprep.subr.mxu0 0.0
    %1332 = vmatpush2.msra.mxu0 %v362
    %1333 = vmatprep.subr.mxu0 0.0
    %1334 = vmatpush2.msra.mxu0 %v361
    %1335 = vmatprep.subr.mxu0 0.0
    %1336 = vmatpush2.msra.mxu0 %v360
    %1337 = vmatprep.subr.mxu0 0.0
    %1338 = vmatpush2.msra.mxu0 %v359
    %1339 = vmatprep.subr.mxu0 0.0
    %1340 = vmatpush2.msra.mxu0 %v358
    %1341 = vmatprep.subr.mxu0 0.0
    %1342 = vmatpush2.msra.mxu0 %v357
    %1343 = vmatprep.subr.mxu0 0.0
    %1344 = vmatpush2.msra.mxu0 %v356
    %1345 = vmatprep.subr.mxu0 0.0
    %1346 = vmatpush2.msra.mxu0 %v355
    %1347 = vmatprep.subr.mxu0 0.0
    %1348 = vmatpush2.msra.mxu0 %v354
    %1349 = vmatprep.subr.mxu0 0.0
    %1350 = vmatpush2.msra.mxu0 %v353
    %1351 = vmatprep.subr.mxu0 0.0
    %1352 = vmatpush2.msra.mxu0 %v352
    %1353 = vmatprep.subr.mxu0 0.0
    %1354 = vmatpush2.msra.mxu0 %v351
    %1355 = vmatprep.subr.mxu0 0.0
    %1356 = vmatpush2.msra.mxu0 %v350
    %1357 = vmatprep.mubr.f32.mxu0 %v670
    %1358 = vmatmul.mubr.f32.gmra.mxu0 %v669
    %v1359 = vpop.f32.mrf.mxu0
    %v1360 = vadd.f32 %v1290, %v1359
    %v1361 = vpop.f32.mrf.mxu0
    %1362 = vdwg.mxu0
    %1363 = vmatprep.subr.mxu0 0.0
    %1364 = vmatpush1.msra.mxu0 %v381
    %1365 = vmatprep.subr.mxu0 0.0
    %1366 = vmatpush1.msra.mxu0 %v380
    %1367 = vmatprep.subr.mxu0 0.0
    %1368 = vmatpush1.msra.mxu0 %v379
    %1369 = vmatprep.subr.mxu0 0.0
    %1370 = vmatpush1.msra.mxu0 %v378
    %1371 = vmatprep.subr.mxu0 0.0
    %1372 = vmatpush1.msra.mxu0 %v377
    %1373 = vmatprep.subr.mxu0 0.0
    %1374 = vmatpush1.msra.mxu0 %v376
    %1375 = vmatprep.subr.mxu0 0.0
    %1376 = vmatpush1.msra.mxu0 %v375
    %1377 = vmatprep.subr.mxu0 0.0
    %1378 = vmatpush1.msra.mxu0 %v374
    %1379 = vmatprep.subr.mxu0 0.0
    %1380 = vmatpush1.msra.mxu0 %v373
    %1381 = vmatprep.subr.mxu0 0.0
    %1382 = vmatpush1.msra.mxu0 %v372
    %1383 = vmatprep.subr.mxu0 0.0
    %1384 = vmatpush1.msra.mxu0 %v371
    %1385 = vmatprep.subr.mxu0 0.0
    %1386 = vmatpush1.msra.mxu0 %v370
    %1387 = vmatprep.subr.mxu0 0.0
    %1388 = vmatpush1.msra.mxu0 %v369
    %1389 = vmatprep.subr.mxu0 0.0
    %1390 = vmatpush1.msra.mxu0 %v368
    %1391 = vmatprep.subr.mxu0 0.0
    %1392 = vmatpush1.msra.mxu0 %v367
    %1393 = vmatprep.subr.mxu0 0.0
    %1394 = vmatpush1.msra.mxu0 %v366
    %1395 = vmatprep.subr.mxu0 0.0
    %1396 = vmatpush2.msra.mxu0 %v397
    %1397 = vmatprep.subr.mxu0 0.0
    %1398 = vmatpush2.msra.mxu0 %v396
    %1399 = vmatprep.subr.mxu0 0.0
    %1400 = vmatpush2.msra.mxu0 %v395
    %1401 = vmatprep.subr.mxu0 0.0
    %1402 = vmatpush2.msra.mxu0 %v394
    %1403 = vmatprep.subr.mxu0 0.0
    %1404 = vmatpush2.msra.mxu0 %v393
    %1405 = vmatprep.subr.mxu0 0.0
    %1406 = vmatpush2.msra.mxu0 %v392
    %1407 = vmatprep.subr.mxu0 0.0
    %1408 = vmatpush2.msra.mxu0 %v391
    %1409 = vmatprep.subr.mxu0 0.0
    %1410 = vmatpush2.msra.mxu0 %v390
    %1411 = vmatprep.subr.mxu0 0.0
    %1412 = vmatpush2.msra.mxu0 %v389
    %1413 = vmatprep.subr.mxu0 0.0
    %1414 = vmatpush2.msra.mxu0 %v388
    %1415 = vmatprep.subr.mxu0 0.0
    %1416 = vmatpush2.msra.mxu0 %v387
    %1417 = vmatprep.subr.mxu0 0.0
    %1418 = vmatpush2.msra.mxu0 %v386
    %1419 = vmatprep.subr.mxu0 0.0
    %1420 = vmatpush2.msra.mxu0 %v385
    %1421 = vmatprep.subr.mxu0 0.0
    %1422 = vmatpush2.msra.mxu0 %v384
    %1423 = vmatprep.subr.mxu0 0.0
    %1424 = vmatpush2.msra.mxu0 %v383
    %1425 = vmatprep.subr.mxu0 0.0
    %1426 = vmatpush2.msra.mxu0 %v382
    %1427 = vmatprep.mubr.f32.mxu0 %v672
    %1428 = vmatmul.mubr.f32.gmra.mxu0 %v671
    %v1429 = vpop.f32.mrf.mxu0
    %v1430 = vadd.f32 %v1360, %v1429
    %v1431 = vpop.f32.mrf.mxu0
    %1432 = vdwg.mxu0
    %1433 = vmatprep.subr.mxu0 0.0
    %1434 = vmatpush1.msra.mxu0 %v413
    %1435 = vmatprep.subr.mxu0 0.0
    %1436 = vmatpush1.msra.mxu0 %v412
    %1437 = vmatprep.subr.mxu0 0.0
    %1438 = vmatpush1.msra.mxu0 %v411
    %1439 = vmatprep.subr.mxu0 0.0
    %1440 = vmatpush1.msra.mxu0 %v410
    %1441 = vmatprep.subr.mxu0 0.0
    %1442 = vmatpush1.msra.mxu0 %v409
    %1443 = vmatprep.subr.mxu0 0.0
    %1444 = vmatpush1.msra.mxu0 %v408
    %1445 = vmatprep.subr.mxu0 0.0
    %1446 = vmatpush1.msra.mxu0 %v407
    %1447 = vmatprep.subr.mxu0 0.0
    %1448 = vmatpush1.msra.mxu0 %v406
    %1449 = vmatprep.subr.mxu0 0.0
    %1450 = vmatpush1.msra.mxu0 %v405
    %1451 = vmatprep.subr.mxu0 0.0
    %1452 = vmatpush1.msra.mxu0 %v404
    %1453 = vmatprep.subr.mxu0 0.0
    %1454 = vmatpush1.msra.mxu0 %v403
    %1455 = vmatprep.subr.mxu0 0.0
    %1456 = vmatpush1.msra.mxu0 %v402
    %1457 = vmatprep.subr.mxu0 0.0
    %1458 = vmatpush1.msra.mxu0 %v401
    %1459 = vmatprep.subr.mxu0 0.0
    %1460 = vmatpush1.msra.mxu0 %v400
    %1461 = vmatprep.subr.mxu0 0.0
    %1462 = vmatpush1.msra.mxu0 %v399
    %1463 = vmatprep.subr.mxu0 0.0
    %1464 = vmatpush1.msra.mxu0 %v398
    %1465 = vmatprep.subr.mxu0 0.0
    %1466 = vmatpush2.msra.mxu0 %v429
    %1467 = vmatprep.subr.mxu0 0.0
    %1468 = vmatpush2.msra.mxu0 %v428
    %1469 = vmatprep.subr.mxu0 0.0
    %1470 = vmatpush2.msra.mxu0 %v427
    %1471 = vmatprep.subr.mxu0 0.0
    %1472 = vmatpush2.msra.mxu0 %v426
    %1473 = vmatprep.subr.mxu0 0.0
    %1474 = vmatpush2.msra.mxu0 %v425
    %1475 = vmatprep.subr.mxu0 0.0
    %1476 = vmatpush2.msra.mxu0 %v424
    %1477 = vmatprep.subr.mxu0 0.0
    %1478 = vmatpush2.msra.mxu0 %v423
    %1479 = vmatprep.subr.mxu0 0.0
    %1480 = vmatpush2.msra.mxu0 %v422
    %1481 = vmatprep.subr.mxu0 0.0
    %1482 = vmatpush2.msra.mxu0 %v421
    %1483 = vmatprep.subr.mxu0 0.0
    %1484 = vmatpush2.msra.mxu0 %v420
    %1485 = vmatprep.subr.mxu0 0.0
    %1486 = vmatpush2.msra.mxu0 %v419
    %1487 = vmatprep.subr.mxu0 0.0
    %1488 = vmatpush2.msra.mxu0 %v418
    %1489 = vmatprep.subr.mxu0 0.0
    %1490 = vmatpush2.msra.mxu0 %v417
    %1491 = vmatprep.subr.mxu0 0.0
    %1492 = vmatpush2.msra.mxu0 %v416
    %1493 = vmatprep.subr.mxu0 0.0
    %1494 = vmatpush2.msra.mxu0 %v415
    %1495 = vmatprep.subr.mxu0 0.0
    %1496 = vmatpush2.msra.mxu0 %v414
    %1497 = vmatprep.mubr.f32.mxu0 %v706
    %1498 = vmatmul.mubr.f32.gmra.mxu0 %v705
    %v1499 = vpop.f32.mrf.mxu0
    %v1500 = vadd.f32 %v1430, %v1499
    %v1501 = vpop.f32.mrf.mxu0
    %1502 = vdwg.mxu0
    %1503 = vmatprep.subr.mxu0 0.0
    %1504 = vmatpush1.msra.mxu0 %v445
    %1505 = vmatprep.subr.mxu0 0.0
    %1506 = vmatpush1.msra.mxu0 %v444
    %1507 = vmatprep.subr.mxu0 0.0
    %1508 = vmatpush1.msra.mxu0 %v443
    %1509 = vmatprep.subr.mxu0 0.0
    %1510 = vmatpush1.msra.mxu0 %v442
    %1511 = vmatprep.subr.mxu0 0.0
    %1512 = vmatpush1.msra.mxu0 %v441
    %1513 = vmatprep.subr.mxu0 0.0
    %1514 = vmatpush1.msra.mxu0 %v440
    %1515 = vmatprep.subr.mxu0 0.0
    %1516 = vmatpush1.msra.mxu0 %v439
    %1517 = vmatprep.subr.mxu0 0.0
    %1518 = vmatpush1.msra.mxu0 %v438
    %1519 = vmatprep.subr.mxu0 0.0
    %1520 = vmatpush1.msra.mxu0 %v437
    %1521 = vmatprep.subr.mxu0 0.0
    %1522 = vmatpush1.msra.mxu0 %v436
    %1523 = vmatprep.subr.mxu0 0.0
    %1524 = vmatpush1.msra.mxu0 %v435
    %1525 = vmatprep.subr.mxu0 0.0
    %1526 = vmatpush1.msra.mxu0 %v434
    %1527 = vmatprep.subr.mxu0 0.0
    %1528 = vmatpush1.msra.mxu0 %v433
    %1529 = vmatprep.subr.mxu0 0.0
    %1530 = vmatpush1.msra.mxu0 %v432
    %1531 = vmatprep.subr.mxu0 0.0
    %1532 = vmatpush1.msra.mxu0 %v431
    %1533 = vmatprep.subr.mxu0 0.0
    %1534 = vmatpush1.msra.mxu0 %v430
    %1535 = vmatprep.subr.mxu0 0.0
    %1536 = vmatpush2.msra.mxu0 %v461
    %1537 = vmatprep.subr.mxu0 0.0
    %1538 = vmatpush2.msra.mxu0 %v460
    %1539 = vmatprep.subr.mxu0 0.0
    %1540 = vmatpush2.msra.mxu0 %v459
    %1541 = vmatprep.subr.mxu0 0.0
    %1542 = vmatpush2.msra.mxu0 %v458
    %1543 = vmatprep.subr.mxu0 0.0
    %1544 = vmatpush2.msra.mxu0 %v457
    %1545 = vmatprep.subr.mxu0 0.0
    %1546 = vmatpush2.msra.mxu0 %v456
    %1547 = vmatprep.subr.mxu0 0.0
    %1548 = vmatpush2.msra.mxu0 %v455
    %1549 = vmatprep.subr.mxu0 0.0
    %1550 = vmatpush2.msra.mxu0 %v454
    %1551 = vmatprep.subr.mxu0 0.0
    %1552 = vmatpush2.msra.mxu0 %v453
    %1553 = vmatprep.subr.mxu0 0.0
    %1554 = vmatpush2.msra.mxu0 %v452
    %1555 = vmatprep.subr.mxu0 0.0
    %1556 = vmatpush2.msra.mxu0 %v451
    %1557 = vmatprep.subr.mxu0 0.0
    %1558 = vmatpush2.msra.mxu0 %v450
    %1559 = vmatprep.subr.mxu0 0.0
    %1560 = vmatpush2.msra.mxu0 %v449
    %1561 = vmatprep.subr.mxu0 0.0
    %1562 = vmatpush2.msra.mxu0 %v448
    %1563 = vmatprep.subr.mxu0 0.0
    %1564 = vmatpush2.msra.mxu0 %v447
    %1565 = vmatprep.subr.mxu0 0.0
    %1566 = vmatpush2.msra.mxu0 %v446
    %1567 = vmatprep.mubr.f32.mxu0 %v708
    %1568 = vmatmul.mubr.f32.gmra.mxu0 %v707
    %v1569 = vpop.f32.mrf.mxu0
    %v1570 = vadd.f32 %v1500, %v1569
    %v1571 = vpop.f32.mrf.mxu0
    %1572 = vdwg.mxu0
    %1573 = vst [vmem:[#allocation8] sm:$0xff] %v1570
    // Predicated region
    $region26: #{tpu_custom_call.1} parent=1 // pred_check
      _
    $region27: #{tpu_custom_call.1} parent=1 // pred_check_branch
      %1575 = sbr.rel (0) target = $region29
    $region28: #{tpu_custom_call.1} parent=1 // pred_region
      %s1577 = ssub.s32 128, 32
      %1578 = vsyncadd [#allocation4], %s1577
      %s1579 = sshll.u32 [#allocation8], 4
      %s1580 = int_to_ptr.vmem [resolvable:$true] %s1579
      %1585 = dma.vmem_to_hbm [thread:$0]  %s1580, 32, %s3, [#allocation4], 32, 32, 2
    $region29: #{tpu_custom_call.1} parent=1 // pred_fallthru
      _
    // Predicated region
    $region30: #{tpu_custom_call.1} parent=1 // pred_check
      _
    $region31: #{tpu_custom_call.1} parent=1 // pred_check_branch
      %1587 = sbr.rel (0) target = $region33
    $region32: #{tpu_custom_call.1} parent=1 // pred_region
      %1588 = dma.done [#allocation4], 128
    $region33: #{tpu_custom_call.1} parent=1 // pred_fallthru
      _
    %1589 = vsyncpa [#allocation3], 1
    %1590 = vsyncpa [#allocation6], 1
    %1591 = vsyncpa [#allocation4], 1

</llo_original>
